<compile_context>
chip_gen: v5e
topology: v5e:2x2
jax: 0.10.0
libtpu: 0.0.40
codegen_flags: <defaults>
</compile_context>

<pallas_src>
import math
import functools

import numpy as np
import jax
import jax.numpy as jnp
from jax.experimental import pallas as pl
from jax.experimental.pallas import tpu as pltpu

# ----- synthetic config / constants (the original imports `config`, `constants`) -----
OMEGA_CUT = 0.55
EPS = 1e-6
N_ANGLE_BINS = 24
STEP = 15.0 * math.pi / 180.0
CUTOFFS = np.linspace(-math.pi + 0.5 * STEP, math.pi + 0.5 * STEP, 25).astype(np.float32)

R_MAX = 32  # max sublane rows per pair tile -> up to 32*128 = 4096 pairs / tile
            # (coeff tile 1.5 MiB f32, double-buffered still well inside scoped VMEM)


# ---------------------------------------------------------------------------
# __init__ glue: periodic cubic spline coefficient fit (plain numpy, static params)
# ---------------------------------------------------------------------------
def periodic_cubic_spline(y):
    """y: (..., 25) with y[..., 24] == y[..., 0]. Returns coeffs (..., 24, 4) = [a,b,c,d]."""
    h = STEP
    n = N_ANGLE_BINS
    A = np.zeros((n, n), dtype=np.float64)
    for i in range(n):
        A[i, i] = 4.0
        A[i, (i - 1) % n] = 1.0
        A[i, (i + 1) % n] = 1.0
    yb = y[..., :n].astype(np.float64)
    rhs = 6.0 * (np.roll(yb, -1, axis=-1) - 2.0 * yb + np.roll(yb, 1, axis=-1)) / (h * h)
    M = np.einsum("ij,...j->...i", np.linalg.inv(A), rhs)      # second derivatives
    Mn = np.roll(M, -1, axis=-1)
    yn = np.roll(yb, -1, axis=-1)
    a = yb
    b = (yn - yb) / h - h * (2.0 * M + Mn) / 6.0
    c = M / 2.0
    d = (Mn - M) / (6.0 * h)
    return np.stack([a, b, c, d], axis=-1).astype(np.float32)   # (..., 24, 4)


# ---------------------------------------------------------------------------
# Pallas kernel: dihedral + periodic cubic spline, accumulated over the batch grid axis
# ---------------------------------------------------------------------------
def _omega_kernel(coords_ref, coeff_ref, o_ref, *, c0, step, r):
    """Grid = (n_pair_tiles, batch).  One step = one (r*128)-pair tile x one batch element.

    coords_ref: (12, r, 128) f32   (batch dim squeezed by the BlockSpec)
    coeff_ref : (4, 24, r, 128) f32  (block index ignores batch -> resident across batch)
    o_ref     : (r, 128) f32        per-pair spline value, accumulated across batch steps
    """
    b = pl.program_id(1)
    two_pi = 2.0 * math.pi

    @pl.when(b == 0)
    def _():
        o_ref[...] = jnp.zeros_like(o_ref)

    # Process the tile in 8-sublane slabs: every temporary is one vreg -> no f32 spills.
    for s in range(r // 8):
        sl = pl.ds(s * 8, 8)                           # static slab slice
        c = coords_ref[:, sl, :]                       # (12, 8, 128)
        p0x, p0y, p0z = c[0], c[1], c[2]               # x_CA
        p1x, p1y, p1z = c[3], c[4], c[5]               # x_CB
        p2x, p2y, p2z = c[6], c[7], c[8]               # y_CB
        p3x, p3y, p3z = c[9], c[10], c[11]             # y_CA

        b0x, b0y, b0z = p0x - p1x, p0y - p1y, p0z - p1z
        b1x, b1y, b1z = p2x - p1x, p2y - p1y, p2z - p1z
        b2x, b2y, b2z = p3x - p2x, p3y - p2y, p3z - p2z

        inv_n1 = jax.lax.rsqrt(b1x * b1x + b1y * b1y + b1z * b1z + 1e-12)
        b1x, b1y, b1z = b1x * inv_n1, b1y * inv_n1, b1z * inv_n1

        d0 = b0x * b1x + b0y * b1y + b0z * b1z
        vx, vy, vz = b0x - d0 * b1x, b0y - d0 * b1y, b0z - d0 * b1z
        d2 = b2x * b1x + b2y * b1y + b2z * b1z
        wx, wy, wz = b2x - d2 * b1x, b2y - d2 * b1y, b2z - d2 * b1z

        xv = vx * wx + vy * wy + vz * wz
        cx = b1y * vz - b1z * vy
        cy = b1z * vx - b1x * vz
        cz = b1x * vy - b1y * vx
        yv = cx * wx + cy * wy + cz * wz

        # TODO(synk): atan2 could be replaced by a reduced-range atan using
        # pl.reciprocal(approx=True) if it shows up as the residual VALU hot spot.
        omega = jnp.arctan2(yv, xv)                    # (8, 128), in (-pi, pi]
        omega = jnp.where(omega < c0, omega + two_pi, omega)

        k_idx = jnp.clip(jnp.floor((omega - c0) / step),
                         0.0, float(N_ANGLE_BINS - 1)).astype(jnp.int32)
        t = omega - (c0 + k_idx.astype(jnp.float32) * step)

        # Unrolled per-bin coefficient select (int32 compare), then ONE Horner.
        # No (24, r, 128) temporaries, no float-iota rebuild per batch step.
        a_s = jnp.zeros_like(t)
        b_s = jnp.zeros_like(t)
        c_s = jnp.zeros_like(t)
        d_s = jnp.zeros_like(t)
        for kbin in range(N_ANGLE_BINS):
            m = k_idx == kbin
            a_s = jnp.where(m, coeff_ref[0, kbin, sl, :], a_s)
            b_s = jnp.where(m, coeff_ref[1, kbin, sl, :], b_s)
            c_s = jnp.where(m, coeff_ref[2, kbin, sl, :], c_s)
            d_s = jnp.where(m, coeff_ref[3, kbin, sl, :], d_s)
        val = a_s + t * (b_s + t * (c_s + t * d_s))

        # Padded lanes: coords are zero -> atan2(0,0) == 0 (finite) and the
        # zero-padded coefficients make their selected spline value exactly 0,
        # so no explicit validity mask is needed.
        o_ref[sl, :] = o_ref[sl, :] + val


# ---------------------------------------------------------------------------
# "__init__": static mask + spline coefficients, packed ONCE into kernel layout
# ---------------------------------------------------------------------------
def build_omega_restraint(pred_omega_np):
    L = pred_omega_np.shape[0]
    mask = np.triu(np.ones((L, L), dtype=bool), k=1) & (pred_omega_np[:, :, -1] < OMEGA_CUT)
    xi, yi = np.where(mask)                                # torch.where(self.mask), host-side
    M = int(xi.shape[0])
    assert M > 0, "no omega restraints selected by the mask"

    bg_omega = 1.0 / N_ANGLE_BINS                          # uniform background
    y = -np.log(pred_omega_np[:, :, :-1] + EPS) + math.log(bg_omega)   # (L, L, 24)
    y = np.concatenate([y, y[:, :, :1]], axis=-1)                       # periodic closure
    coeff = periodic_cubic_spline(y)                                    # (L, L, 24, 4)

    rows = -(-M // 128)                                    # ceil(M / 128) 128-lane rows
    # Sublane rows per tile (multiple of 8, <= R_MAX).  Prefer >= 4 tiles so the
    # "parallel" tile axis can feed both v7x TensorCores.
    r = None
    for cand in (32, 24, 16, 8):
        if -(-rows // cand) >= 4:
            r = cand
            break
    if r is None:
        r = min(R_MAX, ((rows + 7) // 8) * 8)
    n_tiles = -(-rows // r)
    m_rows = n_tiles * r
    m_pad = m_rows * 128

    # Pack per-pair spline coefficients once (static parameter), no batch replication.
    # TODO(synk): on v6e/v7x coeff_packed could be stored as bfloat16 (and on v5e
    # widened once per tile into an f32 VMEM scratch) to halve the dominant HBM
    # stream; kept float32 to match the reference module's numerics exactly.
    cg = coeff[xi, yi]                                     # (M, 24, 4)
    cg = np.transpose(cg, (2, 1, 0))                       # (4, 24, M)
    cg = np.pad(cg, ((0, 0), (0, 0), (0, m_pad - M)))
    coeff_packed = jnp.asarray(cg.reshape(4, N_ANGLE_BINS, m_rows, 128), dtype=jnp.float32)

    return dict(xi=xi, yi=yi, n_pairs=M, r=r, n_tiles=n_tiles,
                m_rows=m_rows, m_pad=m_pad, coeff=coeff, coeff_packed=coeff_packed,
                c0=float(CUTOFFS[0]), step=float(STEP))


# ---------------------------------------------------------------------------
# forward
# ---------------------------------------------------------------------------
def omega_restraint_forward(params, CA, CB):
    B = CA.shape[0]
    xi, yi = params["xi"], params["yi"]
    M, r = params["n_pairs"], params["r"]
    n_tiles, m_rows, m_pad = params["n_tiles"], params["m_rows"], params["m_pad"]

    # Gather the 4 atoms of every restrained pair and lay them out lane-dense.
    # TODO(synk): the original calc_dihedral may additionally drop invalid pairs
    # (e.g. missing CB atoms); here every masked pair is kept.
    pts = jnp.concatenate(
        [CA[:, xi, :], CB[:, xi, :], CB[:, yi, :], CA[:, yi, :]], axis=-1)   # (B, M, 12)
    pts = jnp.swapaxes(pts, 1, 2)                                            # (B, 12, M)
    pts = jnp.pad(pts, ((0, 0), (0, 0), (0, m_pad - M)))
    coords = pts.reshape(B, 12, m_rows, 128).astype(jnp.float32)

    kernel = functools.partial(
        _omega_kernel, c0=params["c0"], step=params["step"], r=r)

    partial_sums = pl.pallas_call(
        kernel,
        out_shape=jax.ShapeDtypeStruct((n_tiles, r, 128), jnp.float32),
        grid=(n_tiles, B),                                  # batch is the inner (reduction) axis
        in_specs=[
            # coords: one batch element per grid step -> VMEM bounded regardless of B
            pl.BlockSpec((None, 12, r, 128), lambda j, b: (b, 0, j, 0)),
            # coeff: block index ignores b -> DMA'd once per tile, resident across batch
            pl.BlockSpec((4, N_ANGLE_BINS, r, 128), lambda j, b: (0, 0, j, 0)),
        ],
        # lane-dense per-tile partials, accumulated across the batch axis
        out_specs=pl.BlockSpec((None, r, 128), lambda j, b: (j, 0, 0)),
        compiler_params=pltpu.CompilerParams(
            dimension_semantics=("parallel", "arbitrary")),  # tiles parallel, batch reduction
    )(coords, params["coeff_packed"])

    return {"pairwise_omega": jnp.sum(partial_sums)}


# ---------------------------------------------------------------------------
# Pure-JAX reference (correctness check)
# ---------------------------------------------------------------------------
def reference_forward(CA, CB, xi, yi, coeff):
    B = CA.shape[0]
    xCA = CA[:, xi, :].reshape(-1, 3)
    xCB = CB[:, xi, :].reshape(-1, 3)
    yCB = CB[:, yi, :].reshape(-1, 3)
    yCA = CA[:, yi, :].reshape(-1, 3)
    b0 = xCA - xCB
    b1 = yCB - xCB
    b2 = yCA - yCB
    b1 = b1 * jax.lax.rsqrt(jnp.sum(b1 * b1, -1, keepdims=True) + 1e-12)
    v = b0 - jnp.sum(b0 * b1, -1, keepdims=True) * b1
    w = b2 - jnp.sum(b2 * b1, -1, keepdims=True) * b1
    x = jnp.sum(v * w, -1)
    y = jnp.sum(jnp.cross(b1, v) * w, -1)
    omega = jnp.arctan2(y, x)
    c0 = float(CUTOFFS[0])
    omega = jnp.where(omega < c0, omega + 2.0 * math.pi, omega)
    k = jnp.clip(jnp.floor((omega - c0) / STEP).astype(jnp.int32), 0, N_ANGLE_BINS - 1)
    t = omega - (c0 + k.astype(jnp.float32) * STEP)
    cg = jnp.tile(jnp.asarray(coeff[xi, yi]), (B, 1, 1))                   # (N, 24, 4)
    csel = jnp.take_along_axis(cg, k[:, None, None], axis=1)[:, 0, :]      # (N, 4)
    val = csel[:, 0] + t * (csel[:, 1] + t * (csel[:, 2] + t * csel[:, 3]))
    return jnp.sum(val)


if __name__ == "__main__":
    key = jax.random.PRNGKey(0)
    L, B = 8, 2
    k1, k2, k3 = jax.random.split(key, 3)

    # ---- module __init__ (deterministic synthetic parameters) ----
    logits = jax.random.normal(k1, (L, L, N_ANGLE_BINS + 1), dtype=jnp.float32)
    pred_omega = np.asarray(jax.nn.softmax(logits, axis=-1), dtype=np.float32)  # (L, L, 25)
    params = build_omega_restraint(pred_omega)

    # ---- forward inputs: coord.CA / coord.CB ----
    CA = jax.random.normal(k2, (B, L, 3), dtype=jnp.float32) * 3.0
    CB = CA + jax.random.normal(k3, (B, L, 3), dtype=jnp.float32)

    fwd = jax.jit(functools.partial(omega_restraint_forward, params))
    out = fwd(CA, CB)
    val = jax.block_until_ready(out["pairwise_omega"])

    ref = jax.block_until_ready(
        reference_forward(CA, CB, params["xi"], params["yi"], params["coeff"]))
    assert np.allclose(np.asarray(val), np.asarray(ref), rtol=1e-2, atol=1e-2), (val, ref)
    print("KERNEL_OK")
</pallas_src>

<mosaic_0001>
module attributes {stable_mosaic.version = 11 : i64} {
  func.func @_omega_kernel(%arg0: i32, %arg1: i32, %arg2: memref<1x12x8x128xf32, #tpu.memory_space<vmem>>, %arg3: memref<4x24x8x128xf32, #tpu.memory_space<vmem>>, %arg4: memref<1x8x128xf32, #tpu.memory_space<vmem>>) attributes {dimension_semantics = [#tpu.dimension_semantics<parallel>, #tpu.dimension_semantics<arbitrary>], iteration_bounds = array<i64: 1, 2>, scalar_prefetch = 0 : i64, scratch_operands = 0 : i64, tpu.core_type = #tpu.core_type<tc>, window_params = [{transform_indices = @transform_0, window_bounds = array<i64: 1, 12, 8, 128>}, {transform_indices = @transform_1, window_bounds = array<i64: 4, 24, 8, 128>}, {transform_indices = @transform_2, window_bounds = array<i64: 1, 8, 128>}]} {
    %c0_i32 = arith.constant 0 : i32
    %0 = arith.cmpi eq, %arg1, %c0_i32 : i32
    %1 = arith.extui %0 : i1 to i32
    %c0_i32_0 = arith.constant 0 : i32
    %2 = arith.cmpi ne, %1, %c0_i32_0 : i32
    scf.if %2 {
      %cst_384 = arith.constant 0.000000e+00 : f32
      %464 = vector.broadcast %cst_384 : f32 to vector<8x128xf32>
      %c0_385 = arith.constant 0 : index
      %c0_386 = arith.constant 0 : index
      %c0_387 = arith.constant 0 : index
      %465 = vector.load %arg4[%c0_385, %c0_386, %c0_387] : memref<1x8x128xf32, #tpu.memory_space<vmem>>, vector<1x8x128xf32>
      %466 = vector.shape_cast %465 : vector<1x8x128xf32> to vector<8x128xf32>
      %467 = vector.shape_cast %464 : vector<8x128xf32> to vector<1x8x128xf32>
      tpu.vector_store %arg4[%c0_385, %c0_386, %c0_387], %467 {strides = array<i32>} : memref<1x8x128xf32, #tpu.memory_space<vmem>>, vector<1x8x128xf32>,
    } else {
    }
    %c0 = arith.constant 0 : index
    %c0_1 = arith.constant 0 : index
    %c0_2 = arith.constant 0 : index
    %c0_3 = arith.constant 0 : index
    %3 = vector.load %arg2[%c0, %c0_1, %c0_2, %c0_3] : memref<1x12x8x128xf32, #tpu.memory_space<vmem>>, vector<1x12x8x128xf32>
    %4 = vector.shape_cast %3 : vector<1x12x8x128xf32> to vector<12x8x128xf32>
    %5 = vector.extract_strided_slice %4 {offsets = [0, 0, 0], sizes = [1, 8, 128], strides = [1, 1, 1]} : vector<12x8x128xf32> to vector<1x8x128xf32>
    %6 = vector.shape_cast %5 : vector<1x8x128xf32> to vector<8x128xf32>
    %7 = vector.extract_strided_slice %4 {offsets = [1, 0, 0], sizes = [1, 8, 128], strides = [1, 1, 1]} : vector<12x8x128xf32> to vector<1x8x128xf32>
    %8 = vector.shape_cast %7 : vector<1x8x128xf32> to vector<8x128xf32>
    %9 = vector.extract_strided_slice %4 {offsets = [2, 0, 0], sizes = [1, 8, 128], strides = [1, 1, 1]} : vector<12x8x128xf32> to vector<1x8x128xf32>
    %10 = vector.shape_cast %9 : vector<1x8x128xf32> to vector<8x128xf32>
    %11 = vector.extract_strided_slice %4 {offsets = [3, 0, 0], sizes = [1, 8, 128], strides = [1, 1, 1]} : vector<12x8x128xf32> to vector<1x8x128xf32>
    %12 = vector.shape_cast %11 : vector<1x8x128xf32> to vector<8x128xf32>
    %13 = vector.extract_strided_slice %4 {offsets = [4, 0, 0], sizes = [1, 8, 128], strides = [1, 1, 1]} : vector<12x8x128xf32> to vector<1x8x128xf32>
    %14 = vector.shape_cast %13 : vector<1x8x128xf32> to vector<8x128xf32>
    %15 = vector.extract_strided_slice %4 {offsets = [5, 0, 0], sizes = [1, 8, 128], strides = [1, 1, 1]} : vector<12x8x128xf32> to vector<1x8x128xf32>
    %16 = vector.shape_cast %15 : vector<1x8x128xf32> to vector<8x128xf32>
    %17 = vector.extract_strided_slice %4 {offsets = [6, 0, 0], sizes = [1, 8, 128], strides = [1, 1, 1]} : vector<12x8x128xf32> to vector<1x8x128xf32>
    %18 = vector.shape_cast %17 : vector<1x8x128xf32> to vector<8x128xf32>
    %19 = vector.extract_strided_slice %4 {offsets = [7, 0, 0], sizes = [1, 8, 128], strides = [1, 1, 1]} : vector<12x8x128xf32> to vector<1x8x128xf32>
    %20 = vector.shape_cast %19 : vector<1x8x128xf32> to vector<8x128xf32>
    %21 = vector.extract_strided_slice %4 {offsets = [8, 0, 0], sizes = [1, 8, 128], strides = [1, 1, 1]} : vector<12x8x128xf32> to vector<1x8x128xf32>
    %22 = vector.shape_cast %21 : vector<1x8x128xf32> to vector<8x128xf32>
    %23 = vector.extract_strided_slice %4 {offsets = [9, 0, 0], sizes = [1, 8, 128], strides = [1, 1, 1]} : vector<12x8x128xf32> to vector<1x8x128xf32>
    %24 = vector.shape_cast %23 : vector<1x8x128xf32> to vector<8x128xf32>
    %25 = vector.extract_strided_slice %4 {offsets = [10, 0, 0], sizes = [1, 8, 128], strides = [1, 1, 1]} : vector<12x8x128xf32> to vector<1x8x128xf32>
    %26 = vector.shape_cast %25 : vector<1x8x128xf32> to vector<8x128xf32>
    %27 = vector.extract_strided_slice %4 {offsets = [11, 0, 0], sizes = [1, 8, 128], strides = [1, 1, 1]} : vector<12x8x128xf32> to vector<1x8x128xf32>
    %28 = vector.shape_cast %27 : vector<1x8x128xf32> to vector<8x128xf32>
    %29 = arith.subf %6, %12 : vector<8x128xf32>
    %30 = arith.subf %8, %14 : vector<8x128xf32>
    %31 = arith.subf %10, %16 : vector<8x128xf32>
    %32 = arith.subf %18, %12 : vector<8x128xf32>
    %33 = arith.subf %20, %14 : vector<8x128xf32>
    %34 = arith.subf %22, %16 : vector<8x128xf32>
    %35 = arith.subf %24, %18 : vector<8x128xf32>
    %36 = arith.subf %26, %20 : vector<8x128xf32>
    %37 = arith.subf %28, %22 : vector<8x128xf32>
    %38 = arith.mulf %32, %32 : vector<8x128xf32>
    %39 = arith.mulf %33, %33 : vector<8x128xf32>
    %40 = arith.addf %38, %39 : vector<8x128xf32>
    %41 = arith.mulf %34, %34 : vector<8x128xf32>
    %42 = arith.addf %40, %41 : vector<8x128xf32>
    %cst = arith.constant 9.99999996E-13 : f32
    %43 = vector.broadcast %cst : f32 to vector<8x128xf32>
    %44 = arith.addf %42, %43 : vector<8x128xf32>
    %45 = math.rsqrt %44 : vector<8x128xf32>
    %46 = arith.mulf %32, %45 : vector<8x128xf32>
    %47 = arith.mulf %33, %45 : vector<8x128xf32>
    %48 = arith.mulf %34, %45 : vector<8x128xf32>
    %49 = arith.mulf %29, %46 : vector<8x128xf32>
    %50 = arith.mulf %30, %47 : vector<8x128xf32>
    %51 = arith.addf %49, %50 : vector<8x128xf32>
    %52 = arith.mulf %31, %48 : vector<8x128xf32>
    %53 = arith.addf %51, %52 : vector<8x128xf32>
    %54 = arith.mulf %53, %46 : vector<8x128xf32>
    %55 = arith.subf %29, %54 : vector<8x128xf32>
    %56 = arith.mulf %53, %47 : vector<8x128xf32>
    %57 = arith.subf %30, %56 : vector<8x128xf32>
    %58 = arith.mulf %53, %48 : vector<8x128xf32>
    %59 = arith.subf %31, %58 : vector<8x128xf32>
    %60 = arith.mulf %35, %46 : vector<8x128xf32>
    %61 = arith.mulf %36, %47 : vector<8x128xf32>
    %62 = arith.addf %60, %61 : vector<8x128xf32>
    %63 = arith.mulf %37, %48 : vector<8x128xf32>
    %64 = arith.addf %62, %63 : vector<8x128xf32>
    %65 = arith.mulf %64, %46 : vector<8x128xf32>
    %66 = arith.subf %35, %65 : vector<8x128xf32>
    %67 = arith.mulf %64, %47 : vector<8x128xf32>
    %68 = arith.subf %36, %67 : vector<8x128xf32>
    %69 = arith.mulf %64, %48 : vector<8x128xf32>
    %70 = arith.subf %37, %69 : vector<8x128xf32>
    %71 = arith.mulf %55, %66 : vector<8x128xf32>
    %72 = arith.mulf %57, %68 : vector<8x128xf32>
    %73 = arith.addf %71, %72 : vector<8x128xf32>
    %74 = arith.mulf %59, %70 : vector<8x128xf32>
    %75 = arith.addf %73, %74 : vector<8x128xf32>
    %76 = arith.mulf %47, %59 : vector<8x128xf32>
    %77 = arith.mulf %48, %57 : vector<8x128xf32>
    %78 = arith.subf %76, %77 : vector<8x128xf32>
    %79 = arith.mulf %48, %55 : vector<8x128xf32>
    %80 = arith.mulf %46, %59 : vector<8x128xf32>
    %81 = arith.subf %79, %80 : vector<8x128xf32>
    %82 = arith.mulf %46, %57 : vector<8x128xf32>
    %83 = arith.mulf %47, %55 : vector<8x128xf32>
    %84 = arith.subf %82, %83 : vector<8x128xf32>
    %85 = arith.mulf %78, %66 : vector<8x128xf32>
    %86 = arith.mulf %81, %68 : vector<8x128xf32>
    %87 = arith.addf %85, %86 : vector<8x128xf32>
    %88 = arith.mulf %84, %70 : vector<8x128xf32>
    %89 = arith.addf %87, %88 : vector<8x128xf32>
    %90 = math.atan2 %89, %75 : vector<8x128xf32>
    %cst_4 = arith.constant -3.01069307 : f32
    %91 = vector.broadcast %cst_4 : f32 to vector<8x128xf32>
    %92 = arith.cmpf olt, %90, %91 : vector<8x128xf32>
    %cst_5 = arith.constant 6.28318548 : f32
    %93 = vector.broadcast %cst_5 : f32 to vector<8x128xf32>
    %94 = arith.addf %90, %93 : vector<8x128xf32>
    %95 = arith.select %92, %94, %90 : vector<8x128xi1>, vector<8x128xf32>
    %cst_6 = arith.constant -3.01069307 : f32
    %96 = vector.broadcast %cst_6 : f32 to vector<8x128xf32>
    %97 = arith.subf %95, %96 : vector<8x128xf32>
    %cst_7 = arith.constant 0.261799395 : f32
    %98 = vector.broadcast %cst_7 : f32 to vector<8x128xf32>
    %99 = arith.divf %97, %98 : vector<8x128xf32>
    %100 = math.floor %99 : vector<8x128xf32>
    %cst_8 = arith.constant 0.000000e+00 : f32
    %cst_9 = arith.constant 2.300000e+01 : f32
    %101 = vector.broadcast %cst_8 : f32 to vector<8x128xf32>
    %102 = arith.maximumf %101, %100 : vector<8x128xf32>
    %103 = vector.broadcast %cst_9 : f32 to vector<8x128xf32>
    %104 = arith.minimumf %103, %102 : vector<8x128xf32>
    %105 = arith.fptosi %104 : vector<8x128xf32> to vector<8x128xi32>
    %106 = arith.sitofp %105 : vector<8x128xi32> to vector<8x128xf32>
    %cst_10 = arith.constant 0.261799395 : f32
    %107 = vector.broadcast %cst_10 : f32 to vector<8x128xf32>
    %108 = arith.mulf %106, %107 : vector<8x128xf32>
    %cst_11 = arith.constant -3.01069307 : f32
    %109 = vector.broadcast %cst_11 : f32 to vector<8x128xf32>
    %110 = arith.addf %109, %108 : vector<8x128xf32>
    %111 = arith.subf %95, %110 : vector<8x128xf32>
    %cst_12 = arith.constant 0.000000e+00 : f32
    %112 = vector.broadcast %cst_12 : f32 to vector<8x128xf32>
    %cst_13 = arith.constant 0.000000e+00 : f32
    %113 = vector.broadcast %cst_13 : f32 to vector<8x128xf32>
    %cst_14 = arith.constant 0.000000e+00 : f32
    %114 = vector.broadcast %cst_14 : f32 to vector<8x128xf32>
    %cst_15 = arith.constant 0.000000e+00 : f32
    %115 = vector.broadcast %cst_15 : f32 to vector<8x128xf32>
    %c0_i32_16 = arith.constant 0 : i32
    %116 = vector.broadcast %c0_i32_16 : i32 to vector<8x128xi32>
    %117 = arith.cmpi eq, %105, %116 : vector<8x128xi32>
    %c0_17 = arith.constant 0 : index
    %c0_18 = arith.constant 0 : index
    %c0_19 = arith.constant 0 : index
    %c0_20 = arith.constant 0 : index
    %118 = vector.load %arg3[%c0_17, %c0_18, %c0_19, %c0_20] : memref<4x24x8x128xf32, #tpu.memory_space<vmem>>, vector<1x1x8x128xf32>
    %119 = vector.shape_cast %118 : vector<1x1x8x128xf32> to vector<8x128xf32>
    %120 = arith.select %117, %119, %112 : vector<8x128xi1>, vector<8x128xf32>
    %c1 = arith.constant 1 : index
    %c0_21 = arith.constant 0 : index
    %c0_22 = arith.constant 0 : index
    %c0_23 = arith.constant 0 : index
    %121 = vector.load %arg3[%c1, %c0_21, %c0_22, %c0_23] : memref<4x24x8x128xf32, #tpu.memory_space<vmem>>, vector<1x1x8x128xf32>
    %122 = vector.shape_cast %121 : vector<1x1x8x128xf32> to vector<8x128xf32>
    %123 = arith.select %117, %122, %113 : vector<8x128xi1>, vector<8x128xf32>
    %c2 = arith.constant 2 : index
    %c0_24 = arith.constant 0 : index
    %c0_25 = arith.constant 0 : index
    %c0_26 = arith.constant 0 : index
    %124 = vector.load %arg3[%c2, %c0_24, %c0_25, %c0_26] : memref<4x24x8x128xf32, #tpu.memory_space<vmem>>, vector<1x1x8x128xf32>
    %125 = vector.shape_cast %124 : vector<1x1x8x128xf32> to vector<8x128xf32>
    %126 = arith.select %117, %125, %114 : vector<8x128xi1>, vector<8x128xf32>
    %c3 = arith.constant 3 : index
    %c0_27 = arith.constant 0 : index
    %c0_28 = arith.constant 0 : index
    %c0_29 = arith.constant 0 : index
    %127 = vector.load %arg3[%c3, %c0_27, %c0_28, %c0_29] : memref<4x24x8x128xf32, #tpu.memory_space<vmem>>, vector<1x1x8x128xf32>
    %128 = vector.shape_cast %127 : vector<1x1x8x128xf32> to vector<8x128xf32>
    %129 = arith.select %117, %128, %115 : vector<8x128xi1>, vector<8x128xf32>
    %c1_i32 = arith.constant 1 : i32
    %130 = vector.broadcast %c1_i32 : i32 to vector<8x128xi32>
    %131 = arith.cmpi eq, %105, %130 : vector<8x128xi32>
    %c0_30 = arith.constant 0 : index
    %c1_31 = arith.constant 1 : index
    %c0_32 = arith.constant 0 : index
    %c0_33 = arith.constant 0 : index
    %132 = vector.load %arg3[%c0_30, %c1_31, %c0_32, %c0_33] : memref<4x24x8x128xf32, #tpu.memory_space<vmem>>, vector<1x1x8x128xf32>
    %133 = vector.shape_cast %132 : vector<1x1x8x128xf32> to vector<8x128xf32>
    %134 = arith.select %131, %133, %120 : vector<8x128xi1>, vector<8x128xf32>
    %c1_34 = arith.constant 1 : index
    %c1_35 = arith.constant 1 : index
    %c0_36 = arith.constant 0 : index
    %c0_37 = arith.constant 0 : index
    %135 = vector.load %arg3[%c1_34, %c1_35, %c0_36, %c0_37] : memref<4x24x8x128xf32, #tpu.memory_space<vmem>>, vector<1x1x8x128xf32>
    %136 = vector.shape_cast %135 : vector<1x1x8x128xf32> to vector<8x128xf32>
    %137 = arith.select %131, %136, %123 : vector<8x128xi1>, vector<8x128xf32>
    %c2_38 = arith.constant 2 : index
    %c1_39 = arith.constant 1 : index
    %c0_40 = arith.constant 0 : index
    %c0_41 = arith.constant 0 : index
    %138 = vector.load %arg3[%c2_38, %c1_39, %c0_40, %c0_41] : memref<4x24x8x128xf32, #tpu.memory_space<vmem>>, vector<1x1x8x128xf32>
    %139 = vector.shape_cast %138 : vector<1x1x8x128xf32> to vector<8x128xf32>
    %140 = arith.select %131, %139, %126 : vector<8x128xi1>, vector<8x128xf32>
    %c3_42 = arith.constant 3 : index
    %c1_43 = arith.constant 1 : index
    %c0_44 = arith.constant 0 : index
    %c0_45 = arith.constant 0 : index
    %141 = vector.load %arg3[%c3_42, %c1_43, %c0_44, %c0_45] : memref<4x24x8x128xf32, #tpu.memory_space<vmem>>, vector<1x1x8x128xf32>
    %142 = vector.shape_cast %141 : vector<1x1x8x128xf32> to vector<8x128xf32>
    %143 = arith.select %131, %142, %129 : vector<8x128xi1>, vector<8x128xf32>
    %c2_i32 = arith.constant 2 : i32
    %144 = vector.broadcast %c2_i32 : i32 to vector<8x128xi32>
    %145 = arith.cmpi eq, %105, %144 : vector<8x128xi32>
    %c0_46 = arith.constant 0 : index
    %c2_47 = arith.constant 2 : index
    %c0_48 = arith.constant 0 : index
    %c0_49 = arith.constant 0 : index
    %146 = vector.load %arg3[%c0_46, %c2_47, %c0_48, %c0_49] : memref<4x24x8x128xf32, #tpu.memory_space<vmem>>, vector<1x1x8x128xf32>
    %147 = vector.shape_cast %146 : vector<1x1x8x128xf32> to vector<8x128xf32>
    %148 = arith.select %145, %147, %134 : vector<8x128xi1>, vector<8x128xf32>
    %c1_50 = arith.constant 1 : index
    %c2_51 = arith.constant 2 : index
    %c0_52 = arith.constant 0 : index
    %c0_53 = arith.constant 0 : index
    %149 = vector.load %arg3[%c1_50, %c2_51, %c0_52, %c0_53] : memref<4x24x8x128xf32, #tpu.memory_space<vmem>>, vector<1x1x8x128xf32>
    %150 = vector.shape_cast %149 : vector<1x1x8x128xf32> to vector<8x128xf32>
    %151 = arith.select %145, %150, %137 : vector<8x128xi1>, vector<8x128xf32>
    %c2_54 = arith.constant 2 : index
    %c2_55 = arith.constant 2 : index
    %c0_56 = arith.constant 0 : index
    %c0_57 = arith.constant 0 : index
    %152 = vector.load %arg3[%c2_54, %c2_55, %c0_56, %c0_57] : memref<4x24x8x128xf32, #tpu.memory_space<vmem>>, vector<1x1x8x128xf32>
    %153 = vector.shape_cast %152 : vector<1x1x8x128xf32> to vector<8x128xf32>
    %154 = arith.select %145, %153, %140 : vector<8x128xi1>, vector<8x128xf32>
    %c3_58 = arith.constant 3 : index
    %c2_59 = arith.constant 2 : index
    %c0_60 = arith.constant 0 : index
    %c0_61 = arith.constant 0 : index
    %155 = vector.load %arg3[%c3_58, %c2_59, %c0_60, %c0_61] : memref<4x24x8x128xf32, #tpu.memory_space<vmem>>, vector<1x1x8x128xf32>
    %156 = vector.shape_cast %155 : vector<1x1x8x128xf32> to vector<8x128xf32>
    %157 = arith.select %145, %156, %143 : vector<8x128xi1>, vector<8x128xf32>
    %c3_i32 = arith.constant 3 : i32
    %158 = vector.broadcast %c3_i32 : i32 to vector<8x128xi32>
    %159 = arith.cmpi eq, %105, %158 : vector<8x128xi32>
    %c0_62 = arith.constant 0 : index
    %c3_63 = arith.constant 3 : index
    %c0_64 = arith.constant 0 : index
    %c0_65 = arith.constant 0 : index
    %160 = vector.load %arg3[%c0_62, %c3_63, %c0_64, %c0_65] : memref<4x24x8x128xf32, #tpu.memory_space<vmem>>, vector<1x1x8x128xf32>
    %161 = vector.shape_cast %160 : vector<1x1x8x128xf32> to vector<8x128xf32>
    %162 = arith.select %159, %161, %148 : vector<8x128xi1>, vector<8x128xf32>
    %c1_66 = arith.constant 1 : index
    %c3_67 = arith.constant 3 : index
    %c0_68 = arith.constant 0 : index
    %c0_69 = arith.constant 0 : index
    %163 = vector.load %arg3[%c1_66, %c3_67, %c0_68, %c0_69] : memref<4x24x8x128xf32, #tpu.memory_space<vmem>>, vector<1x1x8x128xf32>
    %164 = vector.shape_cast %163 : vector<1x1x8x128xf32> to vector<8x128xf32>
    %165 = arith.select %159, %164, %151 : vector<8x128xi1>, vector<8x128xf32>
    %c2_70 = arith.constant 2 : index
    %c3_71 = arith.constant 3 : index
    %c0_72 = arith.constant 0 : index
    %c0_73 = arith.constant 0 : index
    %166 = vector.load %arg3[%c2_70, %c3_71, %c0_72, %c0_73] : memref<4x24x8x128xf32, #tpu.memory_space<vmem>>, vector<1x1x8x128xf32>
    %167 = vector.shape_cast %166 : vector<1x1x8x128xf32> to vector<8x128xf32>
    %168 = arith.select %159, %167, %154 : vector<8x128xi1>, vector<8x128xf32>
    %c3_74 = arith.constant 3 : index
    %c3_75 = arith.constant 3 : index
    %c0_76 = arith.constant 0 : index
    %c0_77 = arith.constant 0 : index
    %169 = vector.load %arg3[%c3_74, %c3_75, %c0_76, %c0_77] : memref<4x24x8x128xf32, #tpu.memory_space<vmem>>, vector<1x1x8x128xf32>
    %170 = vector.shape_cast %169 : vector<1x1x8x128xf32> to vector<8x128xf32>
    %171 = arith.select %159, %170, %157 : vector<8x128xi1>, vector<8x128xf32>
    %c4_i32 = arith.constant 4 : i32
    %172 = vector.broadcast %c4_i32 : i32 to vector<8x128xi32>
    %173 = arith.cmpi eq, %105, %172 : vector<8x128xi32>
    %c0_78 = arith.constant 0 : index
    %c4 = arith.constant 4 : index
    %c0_79 = arith.constant 0 : index
    %c0_80 = arith.constant 0 : index
    %174 = vector.load %arg3[%c0_78, %c4, %c0_79, %c0_80] : memref<4x24x8x128xf32, #tpu.memory_space<vmem>>, vector<1x1x8x128xf32>
    %175 = vector.shape_cast %174 : vector<1x1x8x128xf32> to vector<8x128xf32>
    %176 = arith.select %173, %175, %162 : vector<8x128xi1>, vector<8x128xf32>
    %c1_81 = arith.constant 1 : index
    %c4_82 = arith.constant 4 : index
    %c0_83 = arith.constant 0 : index
    %c0_84 = arith.constant 0 : index
    %177 = vector.load %arg3[%c1_81, %c4_82, %c0_83, %c0_84] : memref<4x24x8x128xf32, #tpu.memory_space<vmem>>, vector<1x1x8x128xf32>
    %178 = vector.shape_cast %177 : vector<1x1x8x128xf32> to vector<8x128xf32>
    %179 = arith.select %173, %178, %165 : vector<8x128xi1>, vector<8x128xf32>
    %c2_85 = arith.constant 2 : index
    %c4_86 = arith.constant 4 : index
    %c0_87 = arith.constant 0 : index
    %c0_88 = arith.constant 0 : index
    %180 = vector.load %arg3[%c2_85, %c4_86, %c0_87, %c0_88] : memref<4x24x8x128xf32, #tpu.memory_space<vmem>>, vector<1x1x8x128xf32>
    %181 = vector.shape_cast %180 : vector<1x1x8x128xf32> to vector<8x128xf32>
    %182 = arith.select %173, %181, %168 : vector<8x128xi1>, vector<8x128xf32>
    %c3_89 = arith.constant 3 : index
    %c4_90 = arith.constant 4 : index
    %c0_91 = arith.constant 0 : index
    %c0_92 = arith.constant 0 : index
    %183 = vector.load %arg3[%c3_89, %c4_90, %c0_91, %c0_92] : memref<4x24x8x128xf32, #tpu.memory_space<vmem>>, vector<1x1x8x128xf32>
    %184 = vector.shape_cast %183 : vector<1x1x8x128xf32> to vector<8x128xf32>
    %185 = arith.select %173, %184, %171 : vector<8x128xi1>, vector<8x128xf32>
    %c5_i32 = arith.constant 5 : i32
    %186 = vector.broadcast %c5_i32 : i32 to vector<8x128xi32>
    %187 = arith.cmpi eq, %105, %186 : vector<8x128xi32>
    %c0_93 = arith.constant 0 : index
    %c5 = arith.constant 5 : index
    %c0_94 = arith.constant 0 : index
    %c0_95 = arith.constant 0 : index
    %188 = vector.load %arg3[%c0_93, %c5, %c0_94, %c0_95] : memref<4x24x8x128xf32, #tpu.memory_space<vmem>>, vector<1x1x8x128xf32>
    %189 = vector.shape_cast %188 : vector<1x1x8x128xf32> to vector<8x128xf32>
    %190 = arith.select %187, %189, %176 : vector<8x128xi1>, vector<8x128xf32>
    %c1_96 = arith.constant 1 : index
    %c5_97 = arith.constant 5 : index
    %c0_98 = arith.constant 0 : index
    %c0_99 = arith.constant 0 : index
    %191 = vector.load %arg3[%c1_96, %c5_97, %c0_98, %c0_99] : memref<4x24x8x128xf32, #tpu.memory_space<vmem>>, vector<1x1x8x128xf32>
    %192 = vector.shape_cast %191 : vector<1x1x8x128xf32> to vector<8x128xf32>
    %193 = arith.select %187, %192, %179 : vector<8x128xi1>, vector<8x128xf32>
    %c2_100 = arith.constant 2 : index
    %c5_101 = arith.constant 5 : index
    %c0_102 = arith.constant 0 : index
    %c0_103 = arith.constant 0 : index
    %194 = vector.load %arg3[%c2_100, %c5_101, %c0_102, %c0_103] : memref<4x24x8x128xf32, #tpu.memory_space<vmem>>, vector<1x1x8x128xf32>
    %195 = vector.shape_cast %194 : vector<1x1x8x128xf32> to vector<8x128xf32>
    %196 = arith.select %187, %195, %182 : vector<8x128xi1>, vector<8x128xf32>
    %c3_104 = arith.constant 3 : index
    %c5_105 = arith.constant 5 : index
    %c0_106 = arith.constant 0 : index
    %c0_107 = arith.constant 0 : index
    %197 = vector.load %arg3[%c3_104, %c5_105, %c0_106, %c0_107] : memref<4x24x8x128xf32, #tpu.memory_space<vmem>>, vector<1x1x8x128xf32>
    %198 = vector.shape_cast %197 : vector<1x1x8x128xf32> to vector<8x128xf32>
    %199 = arith.select %187, %198, %185 : vector<8x128xi1>, vector<8x128xf32>
    %c6_i32 = arith.constant 6 : i32
    %200 = vector.broadcast %c6_i32 : i32 to vector<8x128xi32>
    %201 = arith.cmpi eq, %105, %200 : vector<8x128xi32>
    %c0_108 = arith.constant 0 : index
    %c6 = arith.constant 6 : index
    %c0_109 = arith.constant 0 : index
    %c0_110 = arith.constant 0 : index
    %202 = vector.load %arg3[%c0_108, %c6, %c0_109, %c0_110] : memref<4x24x8x128xf32, #tpu.memory_space<vmem>>, vector<1x1x8x128xf32>
    %203 = vector.shape_cast %202 : vector<1x1x8x128xf32> to vector<8x128xf32>
    %204 = arith.select %201, %203, %190 : vector<8x128xi1>, vector<8x128xf32>
    %c1_111 = arith.constant 1 : index
    %c6_112 = arith.constant 6 : index
    %c0_113 = arith.constant 0 : index
    %c0_114 = arith.constant 0 : index
    %205 = vector.load %arg3[%c1_111, %c6_112, %c0_113, %c0_114] : memref<4x24x8x128xf32, #tpu.memory_space<vmem>>, vector<1x1x8x128xf32>
    %206 = vector.shape_cast %205 : vector<1x1x8x128xf32> to vector<8x128xf32>
    %207 = arith.select %201, %206, %193 : vector<8x128xi1>, vector<8x128xf32>
    %c2_115 = arith.constant 2 : index
    %c6_116 = arith.constant 6 : index
    %c0_117 = arith.constant 0 : index
    %c0_118 = arith.constant 0 : index
    %208 = vector.load %arg3[%c2_115, %c6_116, %c0_117, %c0_118] : memref<4x24x8x128xf32, #tpu.memory_space<vmem>>, vector<1x1x8x128xf32>
    %209 = vector.shape_cast %208 : vector<1x1x8x128xf32> to vector<8x128xf32>
    %210 = arith.select %201, %209, %196 : vector<8x128xi1>, vector<8x128xf32>
    %c3_119 = arith.constant 3 : index
    %c6_120 = arith.constant 6 : index
    %c0_121 = arith.constant 0 : index
    %c0_122 = arith.constant 0 : index
    %211 = vector.load %arg3[%c3_119, %c6_120, %c0_121, %c0_122] : memref<4x24x8x128xf32, #tpu.memory_space<vmem>>, vector<1x1x8x128xf32>
    %212 = vector.shape_cast %211 : vector<1x1x8x128xf32> to vector<8x128xf32>
    %213 = arith.select %201, %212, %199 : vector<8x128xi1>, vector<8x128xf32>
    %c7_i32 = arith.constant 7 : i32
    %214 = vector.broadcast %c7_i32 : i32 to vector<8x128xi32>
    %215 = arith.cmpi eq, %105, %214 : vector<8x128xi32>
    %c0_123 = arith.constant 0 : index
    %c7 = arith.constant 7 : index
    %c0_124 = arith.constant 0 : index
    %c0_125 = arith.constant 0 : index
    %216 = vector.load %arg3[%c0_123, %c7, %c0_124, %c0_125] : memref<4x24x8x128xf32, #tpu.memory_space<vmem>>, vector<1x1x8x128xf32>
    %217 = vector.shape_cast %216 : vector<1x1x8x128xf32> to vector<8x128xf32>
    %218 = arith.select %215, %217, %204 : vector<8x128xi1>, vector<8x128xf32>
    %c1_126 = arith.constant 1 : index
    %c7_127 = arith.constant 7 : index
    %c0_128 = arith.constant 0 : index
    %c0_129 = arith.constant 0 : index
    %219 = vector.load %arg3[%c1_126, %c7_127, %c0_128, %c0_129] : memref<4x24x8x128xf32, #tpu.memory_space<vmem>>, vector<1x1x8x128xf32>
    %220 = vector.shape_cast %219 : vector<1x1x8x128xf32> to vector<8x128xf32>
    %221 = arith.select %215, %220, %207 : vector<8x128xi1>, vector<8x128xf32>
    %c2_130 = arith.constant 2 : index
    %c7_131 = arith.constant 7 : index
    %c0_132 = arith.constant 0 : index
    %c0_133 = arith.constant 0 : index
    %222 = vector.load %arg3[%c2_130, %c7_131, %c0_132, %c0_133] : memref<4x24x8x128xf32, #tpu.memory_space<vmem>>, vector<1x1x8x128xf32>
    %223 = vector.shape_cast %222 : vector<1x1x8x128xf32> to vector<8x128xf32>
    %224 = arith.select %215, %223, %210 : vector<8x128xi1>, vector<8x128xf32>
    %c3_134 = arith.constant 3 : index
    %c7_135 = arith.constant 7 : index
    %c0_136 = arith.constant 0 : index
    %c0_137 = arith.constant 0 : index
    %225 = vector.load %arg3[%c3_134, %c7_135, %c0_136, %c0_137] : memref<4x24x8x128xf32, #tpu.memory_space<vmem>>, vector<1x1x8x128xf32>
    %226 = vector.shape_cast %225 : vector<1x1x8x128xf32> to vector<8x128xf32>
    %227 = arith.select %215, %226, %213 : vector<8x128xi1>, vector<8x128xf32>
    %c8_i32 = arith.constant 8 : i32
    %228 = vector.broadcast %c8_i32 : i32 to vector<8x128xi32>
    %229 = arith.cmpi eq, %105, %228 : vector<8x128xi32>
    %c0_138 = arith.constant 0 : index
    %c8 = arith.constant 8 : index
    %c0_139 = arith.constant 0 : index
    %c0_140 = arith.constant 0 : index
    %230 = vector.load %arg3[%c0_138, %c8, %c0_139, %c0_140] : memref<4x24x8x128xf32, #tpu.memory_space<vmem>>, vector<1x1x8x128xf32>
    %231 = vector.shape_cast %230 : vector<1x1x8x128xf32> to vector<8x128xf32>
    %232 = arith.select %229, %231, %218 : vector<8x128xi1>, vector<8x128xf32>
    %c1_141 = arith.constant 1 : index
    %c8_142 = arith.constant 8 : index
    %c0_143 = arith.constant 0 : index
    %c0_144 = arith.constant 0 : index
    %233 = vector.load %arg3[%c1_141, %c8_142, %c0_143, %c0_144] : memref<4x24x8x128xf32, #tpu.memory_space<vmem>>, vector<1x1x8x128xf32>
    %234 = vector.shape_cast %233 : vector<1x1x8x128xf32> to vector<8x128xf32>
    %235 = arith.select %229, %234, %221 : vector<8x128xi1>, vector<8x128xf32>
    %c2_145 = arith.constant 2 : index
    %c8_146 = arith.constant 8 : index
    %c0_147 = arith.constant 0 : index
    %c0_148 = arith.constant 0 : index
    %236 = vector.load %arg3[%c2_145, %c8_146, %c0_147, %c0_148] : memref<4x24x8x128xf32, #tpu.memory_space<vmem>>, vector<1x1x8x128xf32>
    %237 = vector.shape_cast %236 : vector<1x1x8x128xf32> to vector<8x128xf32>
    %238 = arith.select %229, %237, %224 : vector<8x128xi1>, vector<8x128xf32>
    %c3_149 = arith.constant 3 : index
    %c8_150 = arith.constant 8 : index
    %c0_151 = arith.constant 0 : index
    %c0_152 = arith.constant 0 : index
    %239 = vector.load %arg3[%c3_149, %c8_150, %c0_151, %c0_152] : memref<4x24x8x128xf32, #tpu.memory_space<vmem>>, vector<1x1x8x128xf32>
    %240 = vector.shape_cast %239 : vector<1x1x8x128xf32> to vector<8x128xf32>
    %241 = arith.select %229, %240, %227 : vector<8x128xi1>, vector<8x128xf32>
    %c9_i32 = arith.constant 9 : i32
    %242 = vector.broadcast %c9_i32 : i32 to vector<8x128xi32>
    %243 = arith.cmpi eq, %105, %242 : vector<8x128xi32>
    %c0_153 = arith.constant 0 : index
    %c9 = arith.constant 9 : index
    %c0_154 = arith.constant 0 : index
    %c0_155 = arith.constant 0 : index
    %244 = vector.load %arg3[%c0_153, %c9, %c0_154, %c0_155] : memref<4x24x8x128xf32, #tpu.memory_space<vmem>>, vector<1x1x8x128xf32>
    %245 = vector.shape_cast %244 : vector<1x1x8x128xf32> to vector<8x128xf32>
    %246 = arith.select %243, %245, %232 : vector<8x128xi1>, vector<8x128xf32>
    %c1_156 = arith.constant 1 : index
    %c9_157 = arith.constant 9 : index
    %c0_158 = arith.constant 0 : index
    %c0_159 = arith.constant 0 : index
    %247 = vector.load %arg3[%c1_156, %c9_157, %c0_158, %c0_159] : memref<4x24x8x128xf32, #tpu.memory_space<vmem>>, vector<1x1x8x128xf32>
    %248 = vector.shape_cast %247 : vector<1x1x8x128xf32> to vector<8x128xf32>
    %249 = arith.select %243, %248, %235 : vector<8x128xi1>, vector<8x128xf32>
    %c2_160 = arith.constant 2 : index
    %c9_161 = arith.constant 9 : index
    %c0_162 = arith.constant 0 : index
    %c0_163 = arith.constant 0 : index
    %250 = vector.load %arg3[%c2_160, %c9_161, %c0_162, %c0_163] : memref<4x24x8x128xf32, #tpu.memory_space<vmem>>, vector<1x1x8x128xf32>
    %251 = vector.shape_cast %250 : vector<1x1x8x128xf32> to vector<8x128xf32>
    %252 = arith.select %243, %251, %238 : vector<8x128xi1>, vector<8x128xf32>
    %c3_164 = arith.constant 3 : index
    %c9_165 = arith.constant 9 : index
    %c0_166 = arith.constant 0 : index
    %c0_167 = arith.constant 0 : index
    %253 = vector.load %arg3[%c3_164, %c9_165, %c0_166, %c0_167] : memref<4x24x8x128xf32, #tpu.memory_space<vmem>>, vector<1x1x8x128xf32>
    %254 = vector.shape_cast %253 : vector<1x1x8x128xf32> to vector<8x128xf32>
    %255 = arith.select %243, %254, %241 : vector<8x128xi1>, vector<8x128xf32>
    %c10_i32 = arith.constant 10 : i32
    %256 = vector.broadcast %c10_i32 : i32 to vector<8x128xi32>
    %257 = arith.cmpi eq, %105, %256 : vector<8x128xi32>
    %c0_168 = arith.constant 0 : index
    %c10 = arith.constant 10 : index
    %c0_169 = arith.constant 0 : index
    %c0_170 = arith.constant 0 : index
    %258 = vector.load %arg3[%c0_168, %c10, %c0_169, %c0_170] : memref<4x24x8x128xf32, #tpu.memory_space<vmem>>, vector<1x1x8x128xf32>
    %259 = vector.shape_cast %258 : vector<1x1x8x128xf32> to vector<8x128xf32>
    %260 = arith.select %257, %259, %246 : vector<8x128xi1>, vector<8x128xf32>
    %c1_171 = arith.constant 1 : index
    %c10_172 = arith.constant 10 : index
    %c0_173 = arith.constant 0 : index
    %c0_174 = arith.constant 0 : index
    %261 = vector.load %arg3[%c1_171, %c10_172, %c0_173, %c0_174] : memref<4x24x8x128xf32, #tpu.memory_space<vmem>>, vector<1x1x8x128xf32>
    %262 = vector.shape_cast %261 : vector<1x1x8x128xf32> to vector<8x128xf32>
    %263 = arith.select %257, %262, %249 : vector<8x128xi1>, vector<8x128xf32>
    %c2_175 = arith.constant 2 : index
    %c10_176 = arith.constant 10 : index
    %c0_177 = arith.constant 0 : index
    %c0_178 = arith.constant 0 : index
    %264 = vector.load %arg3[%c2_175, %c10_176, %c0_177, %c0_178] : memref<4x24x8x128xf32, #tpu.memory_space<vmem>>, vector<1x1x8x128xf32>
    %265 = vector.shape_cast %264 : vector<1x1x8x128xf32> to vector<8x128xf32>
    %266 = arith.select %257, %265, %252 : vector<8x128xi1>, vector<8x128xf32>
    %c3_179 = arith.constant 3 : index
    %c10_180 = arith.constant 10 : index
    %c0_181 = arith.constant 0 : index
    %c0_182 = arith.constant 0 : index
    %267 = vector.load %arg3[%c3_179, %c10_180, %c0_181, %c0_182] : memref<4x24x8x128xf32, #tpu.memory_space<vmem>>, vector<1x1x8x128xf32>
    %268 = vector.shape_cast %267 : vector<1x1x8x128xf32> to vector<8x128xf32>
    %269 = arith.select %257, %268, %255 : vector<8x128xi1>, vector<8x128xf32>
    %c11_i32 = arith.constant 11 : i32
    %270 = vector.broadcast %c11_i32 : i32 to vector<8x128xi32>
    %271 = arith.cmpi eq, %105, %270 : vector<8x128xi32>
    %c0_183 = arith.constant 0 : index
    %c11 = arith.constant 11 : index
    %c0_184 = arith.constant 0 : index
    %c0_185 = arith.constant 0 : index
    %272 = vector.load %arg3[%c0_183, %c11, %c0_184, %c0_185] : memref<4x24x8x128xf32, #tpu.memory_space<vmem>>, vector<1x1x8x128xf32>
    %273 = vector.shape_cast %272 : vector<1x1x8x128xf32> to vector<8x128xf32>
    %274 = arith.select %271, %273, %260 : vector<8x128xi1>, vector<8x128xf32>
    %c1_186 = arith.constant 1 : index
    %c11_187 = arith.constant 11 : index
    %c0_188 = arith.constant 0 : index
    %c0_189 = arith.constant 0 : index
    %275 = vector.load %arg3[%c1_186, %c11_187, %c0_188, %c0_189] : memref<4x24x8x128xf32, #tpu.memory_space<vmem>>, vector<1x1x8x128xf32>
    %276 = vector.shape_cast %275 : vector<1x1x8x128xf32> to vector<8x128xf32>
    %277 = arith.select %271, %276, %263 : vector<8x128xi1>, vector<8x128xf32>
    %c2_190 = arith.constant 2 : index
    %c11_191 = arith.constant 11 : index
    %c0_192 = arith.constant 0 : index
    %c0_193 = arith.constant 0 : index
    %278 = vector.load %arg3[%c2_190, %c11_191, %c0_192, %c0_193] : memref<4x24x8x128xf32, #tpu.memory_space<vmem>>, vector<1x1x8x128xf32>
    %279 = vector.shape_cast %278 : vector<1x1x8x128xf32> to vector<8x128xf32>
    %280 = arith.select %271, %279, %266 : vector<8x128xi1>, vector<8x128xf32>
    %c3_194 = arith.constant 3 : index
    %c11_195 = arith.constant 11 : index
    %c0_196 = arith.constant 0 : index
    %c0_197 = arith.constant 0 : index
    %281 = vector.load %arg3[%c3_194, %c11_195, %c0_196, %c0_197] : memref<4x24x8x128xf32, #tpu.memory_space<vmem>>, vector<1x1x8x128xf32>
    %282 = vector.shape_cast %281 : vector<1x1x8x128xf32> to vector<8x128xf32>
    %283 = arith.select %271, %282, %269 : vector<8x128xi1>, vector<8x128xf32>
    %c12_i32 = arith.constant 12 : i32
    %284 = vector.broadcast %c12_i32 : i32 to vector<8x128xi32>
    %285 = arith.cmpi eq, %105, %284 : vector<8x128xi32>
    %c0_198 = arith.constant 0 : index
    %c12 = arith.constant 12 : index
    %c0_199 = arith.constant 0 : index
    %c0_200 = arith.constant 0 : index
    %286 = vector.load %arg3[%c0_198, %c12, %c0_199, %c0_200] : memref<4x24x8x128xf32, #tpu.memory_space<vmem>>, vector<1x1x8x128xf32>
    %287 = vector.shape_cast %286 : vector<1x1x8x128xf32> to vector<8x128xf32>
    %288 = arith.select %285, %287, %274 : vector<8x128xi1>, vector<8x128xf32>
    %c1_201 = arith.constant 1 : index
    %c12_202 = arith.constant 12 : index
    %c0_203 = arith.constant 0 : index
    %c0_204 = arith.constant 0 : index
    %289 = vector.load %arg3[%c1_201, %c12_202, %c0_203, %c0_204] : memref<4x24x8x128xf32, #tpu.memory_space<vmem>>, vector<1x1x8x128xf32>
    %290 = vector.shape_cast %289 : vector<1x1x8x128xf32> to vector<8x128xf32>
    %291 = arith.select %285, %290, %277 : vector<8x128xi1>, vector<8x128xf32>
    %c2_205 = arith.constant 2 : index
    %c12_206 = arith.constant 12 : index
    %c0_207 = arith.constant 0 : index
    %c0_208 = arith.constant 0 : index
    %292 = vector.load %arg3[%c2_205, %c12_206, %c0_207, %c0_208] : memref<4x24x8x128xf32, #tpu.memory_space<vmem>>, vector<1x1x8x128xf32>
    %293 = vector.shape_cast %292 : vector<1x1x8x128xf32> to vector<8x128xf32>
    %294 = arith.select %285, %293, %280 : vector<8x128xi1>, vector<8x128xf32>
    %c3_209 = arith.constant 3 : index
    %c12_210 = arith.constant 12 : index
    %c0_211 = arith.constant 0 : index
    %c0_212 = arith.constant 0 : index
    %295 = vector.load %arg3[%c3_209, %c12_210, %c0_211, %c0_212] : memref<4x24x8x128xf32, #tpu.memory_space<vmem>>, vector<1x1x8x128xf32>
    %296 = vector.shape_cast %295 : vector<1x1x8x128xf32> to vector<8x128xf32>
    %297 = arith.select %285, %296, %283 : vector<8x128xi1>, vector<8x128xf32>
    %c13_i32 = arith.constant 13 : i32
    %298 = vector.broadcast %c13_i32 : i32 to vector<8x128xi32>
    %299 = arith.cmpi eq, %105, %298 : vector<8x128xi32>
    %c0_213 = arith.constant 0 : index
    %c13 = arith.constant 13 : index
    %c0_214 = arith.constant 0 : index
    %c0_215 = arith.constant 0 : index
    %300 = vector.load %arg3[%c0_213, %c13, %c0_214, %c0_215] : memref<4x24x8x128xf32, #tpu.memory_space<vmem>>, vector<1x1x8x128xf32>
    %301 = vector.shape_cast %300 : vector<1x1x8x128xf32> to vector<8x128xf32>
    %302 = arith.select %299, %301, %288 : vector<8x128xi1>, vector<8x128xf32>
    %c1_216 = arith.constant 1 : index
    %c13_217 = arith.constant 13 : index
    %c0_218 = arith.constant 0 : index
    %c0_219 = arith.constant 0 : index
    %303 = vector.load %arg3[%c1_216, %c13_217, %c0_218, %c0_219] : memref<4x24x8x128xf32, #tpu.memory_space<vmem>>, vector<1x1x8x128xf32>
    %304 = vector.shape_cast %303 : vector<1x1x8x128xf32> to vector<8x128xf32>
    %305 = arith.select %299, %304, %291 : vector<8x128xi1>, vector<8x128xf32>
    %c2_220 = arith.constant 2 : index
    %c13_221 = arith.constant 13 : index
    %c0_222 = arith.constant 0 : index
    %c0_223 = arith.constant 0 : index
    %306 = vector.load %arg3[%c2_220, %c13_221, %c0_222, %c0_223] : memref<4x24x8x128xf32, #tpu.memory_space<vmem>>, vector<1x1x8x128xf32>
    %307 = vector.shape_cast %306 : vector<1x1x8x128xf32> to vector<8x128xf32>
    %308 = arith.select %299, %307, %294 : vector<8x128xi1>, vector<8x128xf32>
    %c3_224 = arith.constant 3 : index
    %c13_225 = arith.constant 13 : index
    %c0_226 = arith.constant 0 : index
    %c0_227 = arith.constant 0 : index
    %309 = vector.load %arg3[%c3_224, %c13_225, %c0_226, %c0_227] : memref<4x24x8x128xf32, #tpu.memory_space<vmem>>, vector<1x1x8x128xf32>
    %310 = vector.shape_cast %309 : vector<1x1x8x128xf32> to vector<8x128xf32>
    %311 = arith.select %299, %310, %297 : vector<8x128xi1>, vector<8x128xf32>
    %c14_i32 = arith.constant 14 : i32
    %312 = vector.broadcast %c14_i32 : i32 to vector<8x128xi32>
    %313 = arith.cmpi eq, %105, %312 : vector<8x128xi32>
    %c0_228 = arith.constant 0 : index
    %c14 = arith.constant 14 : index
    %c0_229 = arith.constant 0 : index
    %c0_230 = arith.constant 0 : index
    %314 = vector.load %arg3[%c0_228, %c14, %c0_229, %c0_230] : memref<4x24x8x128xf32, #tpu.memory_space<vmem>>, vector<1x1x8x128xf32>
    %315 = vector.shape_cast %314 : vector<1x1x8x128xf32> to vector<8x128xf32>
    %316 = arith.select %313, %315, %302 : vector<8x128xi1>, vector<8x128xf32>
    %c1_231 = arith.constant 1 : index
    %c14_232 = arith.constant 14 : index
    %c0_233 = arith.constant 0 : index
    %c0_234 = arith.constant 0 : index
    %317 = vector.load %arg3[%c1_231, %c14_232, %c0_233, %c0_234] : memref<4x24x8x128xf32, #tpu.memory_space<vmem>>, vector<1x1x8x128xf32>
    %318 = vector.shape_cast %317 : vector<1x1x8x128xf32> to vector<8x128xf32>
    %319 = arith.select %313, %318, %305 : vector<8x128xi1>, vector<8x128xf32>
    %c2_235 = arith.constant 2 : index
    %c14_236 = arith.constant 14 : index
    %c0_237 = arith.constant 0 : index
    %c0_238 = arith.constant 0 : index
    %320 = vector.load %arg3[%c2_235, %c14_236, %c0_237, %c0_238] : memref<4x24x8x128xf32, #tpu.memory_space<vmem>>, vector<1x1x8x128xf32>
    %321 = vector.shape_cast %320 : vector<1x1x8x128xf32> to vector<8x128xf32>
    %322 = arith.select %313, %321, %308 : vector<8x128xi1>, vector<8x128xf32>
    %c3_239 = arith.constant 3 : index
    %c14_240 = arith.constant 14 : index
    %c0_241 = arith.constant 0 : index
    %c0_242 = arith.constant 0 : index
    %323 = vector.load %arg3[%c3_239, %c14_240, %c0_241, %c0_242] : memref<4x24x8x128xf32, #tpu.memory_space<vmem>>, vector<1x1x8x128xf32>
    %324 = vector.shape_cast %323 : vector<1x1x8x128xf32> to vector<8x128xf32>
    %325 = arith.select %313, %324, %311 : vector<8x128xi1>, vector<8x128xf32>
    %c15_i32 = arith.constant 15 : i32
    %326 = vector.broadcast %c15_i32 : i32 to vector<8x128xi32>
    %327 = arith.cmpi eq, %105, %326 : vector<8x128xi32>
    %c0_243 = arith.constant 0 : index
    %c15 = arith.constant 15 : index
    %c0_244 = arith.constant 0 : index
    %c0_245 = arith.constant 0 : index
    %328 = vector.load %arg3[%c0_243, %c15, %c0_244, %c0_245] : memref<4x24x8x128xf32, #tpu.memory_space<vmem>>, vector<1x1x8x128xf32>
    %329 = vector.shape_cast %328 : vector<1x1x8x128xf32> to vector<8x128xf32>
    %330 = arith.select %327, %329, %316 : vector<8x128xi1>, vector<8x128xf32>
    %c1_246 = arith.constant 1 : index
    %c15_247 = arith.constant 15 : index
    %c0_248 = arith.constant 0 : index
    %c0_249 = arith.constant 0 : index
    %331 = vector.load %arg3[%c1_246, %c15_247, %c0_248, %c0_249] : memref<4x24x8x128xf32, #tpu.memory_space<vmem>>, vector<1x1x8x128xf32>
    %332 = vector.shape_cast %331 : vector<1x1x8x128xf32> to vector<8x128xf32>
    %333 = arith.select %327, %332, %319 : vector<8x128xi1>, vector<8x128xf32>
    %c2_250 = arith.constant 2 : index
    %c15_251 = arith.constant 15 : index
    %c0_252 = arith.constant 0 : index
    %c0_253 = arith.constant 0 : index
    %334 = vector.load %arg3[%c2_250, %c15_251, %c0_252, %c0_253] : memref<4x24x8x128xf32, #tpu.memory_space<vmem>>, vector<1x1x8x128xf32>
    %335 = vector.shape_cast %334 : vector<1x1x8x128xf32> to vector<8x128xf32>
    %336 = arith.select %327, %335, %322 : vector<8x128xi1>, vector<8x128xf32>
    %c3_254 = arith.constant 3 : index
    %c15_255 = arith.constant 15 : index
    %c0_256 = arith.constant 0 : index
    %c0_257 = arith.constant 0 : index
    %337 = vector.load %arg3[%c3_254, %c15_255, %c0_256, %c0_257] : memref<4x24x8x128xf32, #tpu.memory_space<vmem>>, vector<1x1x8x128xf32>
    %338 = vector.shape_cast %337 : vector<1x1x8x128xf32> to vector<8x128xf32>
    %339 = arith.select %327, %338, %325 : vector<8x128xi1>, vector<8x128xf32>
    %c16_i32 = arith.constant 16 : i32
    %340 = vector.broadcast %c16_i32 : i32 to vector<8x128xi32>
    %341 = arith.cmpi eq, %105, %340 : vector<8x128xi32>
    %c0_258 = arith.constant 0 : index
    %c16 = arith.constant 16 : index
    %c0_259 = arith.constant 0 : index
    %c0_260 = arith.constant 0 : index
    %342 = vector.load %arg3[%c0_258, %c16, %c0_259, %c0_260] : memref<4x24x8x128xf32, #tpu.memory_space<vmem>>, vector<1x1x8x128xf32>
    %343 = vector.shape_cast %342 : vector<1x1x8x128xf32> to vector<8x128xf32>
    %344 = arith.select %341, %343, %330 : vector<8x128xi1>, vector<8x128xf32>
    %c1_261 = arith.constant 1 : index
    %c16_262 = arith.constant 16 : index
    %c0_263 = arith.constant 0 : index
    %c0_264 = arith.constant 0 : index
    %345 = vector.load %arg3[%c1_261, %c16_262, %c0_263, %c0_264] : memref<4x24x8x128xf32, #tpu.memory_space<vmem>>, vector<1x1x8x128xf32>
    %346 = vector.shape_cast %345 : vector<1x1x8x128xf32> to vector<8x128xf32>
    %347 = arith.select %341, %346, %333 : vector<8x128xi1>, vector<8x128xf32>
    %c2_265 = arith.constant 2 : index
    %c16_266 = arith.constant 16 : index
    %c0_267 = arith.constant 0 : index
    %c0_268 = arith.constant 0 : index
    %348 = vector.load %arg3[%c2_265, %c16_266, %c0_267, %c0_268] : memref<4x24x8x128xf32, #tpu.memory_space<vmem>>, vector<1x1x8x128xf32>
    %349 = vector.shape_cast %348 : vector<1x1x8x128xf32> to vector<8x128xf32>
    %350 = arith.select %341, %349, %336 : vector<8x128xi1>, vector<8x128xf32>
    %c3_269 = arith.constant 3 : index
    %c16_270 = arith.constant 16 : index
    %c0_271 = arith.constant 0 : index
    %c0_272 = arith.constant 0 : index
    %351 = vector.load %arg3[%c3_269, %c16_270, %c0_271, %c0_272] : memref<4x24x8x128xf32, #tpu.memory_space<vmem>>, vector<1x1x8x128xf32>
    %352 = vector.shape_cast %351 : vector<1x1x8x128xf32> to vector<8x128xf32>
    %353 = arith.select %341, %352, %339 : vector<8x128xi1>, vector<8x128xf32>
    %c17_i32 = arith.constant 17 : i32
    %354 = vector.broadcast %c17_i32 : i32 to vector<8x128xi32>
    %355 = arith.cmpi eq, %105, %354 : vector<8x128xi32>
    %c0_273 = arith.constant 0 : index
    %c17 = arith.constant 17 : index
    %c0_274 = arith.constant 0 : index
    %c0_275 = arith.constant 0 : index
    %356 = vector.load %arg3[%c0_273, %c17, %c0_274, %c0_275] : memref<4x24x8x128xf32, #tpu.memory_space<vmem>>, vector<1x1x8x128xf32>
    %357 = vector.shape_cast %356 : vector<1x1x8x128xf32> to vector<8x128xf32>
    %358 = arith.select %355, %357, %344 : vector<8x128xi1>, vector<8x128xf32>
    %c1_276 = arith.constant 1 : index
    %c17_277 = arith.constant 17 : index
    %c0_278 = arith.constant 0 : index
    %c0_279 = arith.constant 0 : index
    %359 = vector.load %arg3[%c1_276, %c17_277, %c0_278, %c0_279] : memref<4x24x8x128xf32, #tpu.memory_space<vmem>>, vector<1x1x8x128xf32>
    %360 = vector.shape_cast %359 : vector<1x1x8x128xf32> to vector<8x128xf32>
    %361 = arith.select %355, %360, %347 : vector<8x128xi1>, vector<8x128xf32>
    %c2_280 = arith.constant 2 : index
    %c17_281 = arith.constant 17 : index
    %c0_282 = arith.constant 0 : index
    %c0_283 = arith.constant 0 : index
    %362 = vector.load %arg3[%c2_280, %c17_281, %c0_282, %c0_283] : memref<4x24x8x128xf32, #tpu.memory_space<vmem>>, vector<1x1x8x128xf32>
    %363 = vector.shape_cast %362 : vector<1x1x8x128xf32> to vector<8x128xf32>
    %364 = arith.select %355, %363, %350 : vector<8x128xi1>, vector<8x128xf32>
    %c3_284 = arith.constant 3 : index
    %c17_285 = arith.constant 17 : index
    %c0_286 = arith.constant 0 : index
    %c0_287 = arith.constant 0 : index
    %365 = vector.load %arg3[%c3_284, %c17_285, %c0_286, %c0_287] : memref<4x24x8x128xf32, #tpu.memory_space<vmem>>, vector<1x1x8x128xf32>
    %366 = vector.shape_cast %365 : vector<1x1x8x128xf32> to vector<8x128xf32>
    %367 = arith.select %355, %366, %353 : vector<8x128xi1>, vector<8x128xf32>
    %c18_i32 = arith.constant 18 : i32
    %368 = vector.broadcast %c18_i32 : i32 to vector<8x128xi32>
    %369 = arith.cmpi eq, %105, %368 : vector<8x128xi32>
    %c0_288 = arith.constant 0 : index
    %c18 = arith.constant 18 : index
    %c0_289 = arith.constant 0 : index
    %c0_290 = arith.constant 0 : index
    %370 = vector.load %arg3[%c0_288, %c18, %c0_289, %c0_290] : memref<4x24x8x128xf32, #tpu.memory_space<vmem>>, vector<1x1x8x128xf32>
    %371 = vector.shape_cast %370 : vector<1x1x8x128xf32> to vector<8x128xf32>
    %372 = arith.select %369, %371, %358 : vector<8x128xi1>, vector<8x128xf32>
    %c1_291 = arith.constant 1 : index
    %c18_292 = arith.constant 18 : index
    %c0_293 = arith.constant 0 : index
    %c0_294 = arith.constant 0 : index
    %373 = vector.load %arg3[%c1_291, %c18_292, %c0_293, %c0_294] : memref<4x24x8x128xf32, #tpu.memory_space<vmem>>, vector<1x1x8x128xf32>
    %374 = vector.shape_cast %373 : vector<1x1x8x128xf32> to vector<8x128xf32>
    %375 = arith.select %369, %374, %361 : vector<8x128xi1>, vector<8x128xf32>
    %c2_295 = arith.constant 2 : index
    %c18_296 = arith.constant 18 : index
    %c0_297 = arith.constant 0 : index
    %c0_298 = arith.constant 0 : index
    %376 = vector.load %arg3[%c2_295, %c18_296, %c0_297, %c0_298] : memref<4x24x8x128xf32, #tpu.memory_space<vmem>>, vector<1x1x8x128xf32>
    %377 = vector.shape_cast %376 : vector<1x1x8x128xf32> to vector<8x128xf32>
    %378 = arith.select %369, %377, %364 : vector<8x128xi1>, vector<8x128xf32>
    %c3_299 = arith.constant 3 : index
    %c18_300 = arith.constant 18 : index
    %c0_301 = arith.constant 0 : index
    %c0_302 = arith.constant 0 : index
    %379 = vector.load %arg3[%c3_299, %c18_300, %c0_301, %c0_302] : memref<4x24x8x128xf32, #tpu.memory_space<vmem>>, vector<1x1x8x128xf32>
    %380 = vector.shape_cast %379 : vector<1x1x8x128xf32> to vector<8x128xf32>
    %381 = arith.select %369, %380, %367 : vector<8x128xi1>, vector<8x128xf32>
    %c19_i32 = arith.constant 19 : i32
    %382 = vector.broadcast %c19_i32 : i32 to vector<8x128xi32>
    %383 = arith.cmpi eq, %105, %382 : vector<8x128xi32>
    %c0_303 = arith.constant 0 : index
    %c19 = arith.constant 19 : index
    %c0_304 = arith.constant 0 : index
    %c0_305 = arith.constant 0 : index
    %384 = vector.load %arg3[%c0_303, %c19, %c0_304, %c0_305] : memref<4x24x8x128xf32, #tpu.memory_space<vmem>>, vector<1x1x8x128xf32>
    %385 = vector.shape_cast %384 : vector<1x1x8x128xf32> to vector<8x128xf32>
    %386 = arith.select %383, %385, %372 : vector<8x128xi1>, vector<8x128xf32>
    %c1_306 = arith.constant 1 : index
    %c19_307 = arith.constant 19 : index
    %c0_308 = arith.constant 0 : index
    %c0_309 = arith.constant 0 : index
    %387 = vector.load %arg3[%c1_306, %c19_307, %c0_308, %c0_309] : memref<4x24x8x128xf32, #tpu.memory_space<vmem>>, vector<1x1x8x128xf32>
    %388 = vector.shape_cast %387 : vector<1x1x8x128xf32> to vector<8x128xf32>
    %389 = arith.select %383, %388, %375 : vector<8x128xi1>, vector<8x128xf32>
    %c2_310 = arith.constant 2 : index
    %c19_311 = arith.constant 19 : index
    %c0_312 = arith.constant 0 : index
    %c0_313 = arith.constant 0 : index
    %390 = vector.load %arg3[%c2_310, %c19_311, %c0_312, %c0_313] : memref<4x24x8x128xf32, #tpu.memory_space<vmem>>, vector<1x1x8x128xf32>
    %391 = vector.shape_cast %390 : vector<1x1x8x128xf32> to vector<8x128xf32>
    %392 = arith.select %383, %391, %378 : vector<8x128xi1>, vector<8x128xf32>
    %c3_314 = arith.constant 3 : index
    %c19_315 = arith.constant 19 : index
    %c0_316 = arith.constant 0 : index
    %c0_317 = arith.constant 0 : index
    %393 = vector.load %arg3[%c3_314, %c19_315, %c0_316, %c0_317] : memref<4x24x8x128xf32, #tpu.memory_space<vmem>>, vector<1x1x8x128xf32>
    %394 = vector.shape_cast %393 : vector<1x1x8x128xf32> to vector<8x128xf32>
    %395 = arith.select %383, %394, %381 : vector<8x128xi1>, vector<8x128xf32>
    %c20_i32 = arith.constant 20 : i32
    %396 = vector.broadcast %c20_i32 : i32 to vector<8x128xi32>
    %397 = arith.cmpi eq, %105, %396 : vector<8x128xi32>
    %c0_318 = arith.constant 0 : index
    %c20 = arith.constant 20 : index
    %c0_319 = arith.constant 0 : index
    %c0_320 = arith.constant 0 : index
    %398 = vector.load %arg3[%c0_318, %c20, %c0_319, %c0_320] : memref<4x24x8x128xf32, #tpu.memory_space<vmem>>, vector<1x1x8x128xf32>
    %399 = vector.shape_cast %398 : vector<1x1x8x128xf32> to vector<8x128xf32>
    %400 = arith.select %397, %399, %386 : vector<8x128xi1>, vector<8x128xf32>
    %c1_321 = arith.constant 1 : index
    %c20_322 = arith.constant 20 : index
    %c0_323 = arith.constant 0 : index
    %c0_324 = arith.constant 0 : index
    %401 = vector.load %arg3[%c1_321, %c20_322, %c0_323, %c0_324] : memref<4x24x8x128xf32, #tpu.memory_space<vmem>>, vector<1x1x8x128xf32>
    %402 = vector.shape_cast %401 : vector<1x1x8x128xf32> to vector<8x128xf32>
    %403 = arith.select %397, %402, %389 : vector<8x128xi1>, vector<8x128xf32>
    %c2_325 = arith.constant 2 : index
    %c20_326 = arith.constant 20 : index
    %c0_327 = arith.constant 0 : index
    %c0_328 = arith.constant 0 : index
    %404 = vector.load %arg3[%c2_325, %c20_326, %c0_327, %c0_328] : memref<4x24x8x128xf32, #tpu.memory_space<vmem>>, vector<1x1x8x128xf32>
    %405 = vector.shape_cast %404 : vector<1x1x8x128xf32> to vector<8x128xf32>
    %406 = arith.select %397, %405, %392 : vector<8x128xi1>, vector<8x128xf32>
    %c3_329 = arith.constant 3 : index
    %c20_330 = arith.constant 20 : index
    %c0_331 = arith.constant 0 : index
    %c0_332 = arith.constant 0 : index
    %407 = vector.load %arg3[%c3_329, %c20_330, %c0_331, %c0_332] : memref<4x24x8x128xf32, #tpu.memory_space<vmem>>, vector<1x1x8x128xf32>
    %408 = vector.shape_cast %407 : vector<1x1x8x128xf32> to vector<8x128xf32>
    %409 = arith.select %397, %408, %395 : vector<8x128xi1>, vector<8x128xf32>
    %c21_i32 = arith.constant 21 : i32
    %410 = vector.broadcast %c21_i32 : i32 to vector<8x128xi32>
    %411 = arith.cmpi eq, %105, %410 : vector<8x128xi32>
    %c0_333 = arith.constant 0 : index
    %c21 = arith.constant 21 : index
    %c0_334 = arith.constant 0 : index
    %c0_335 = arith.constant 0 : index
    %412 = vector.load %arg3[%c0_333, %c21, %c0_334, %c0_335] : memref<4x24x8x128xf32, #tpu.memory_space<vmem>>, vector<1x1x8x128xf32>
    %413 = vector.shape_cast %412 : vector<1x1x8x128xf32> to vector<8x128xf32>
    %414 = arith.select %411, %413, %400 : vector<8x128xi1>, vector<8x128xf32>
    %c1_336 = arith.constant 1 : index
    %c21_337 = arith.constant 21 : index
    %c0_338 = arith.constant 0 : index
    %c0_339 = arith.constant 0 : index
    %415 = vector.load %arg3[%c1_336, %c21_337, %c0_338, %c0_339] : memref<4x24x8x128xf32, #tpu.memory_space<vmem>>, vector<1x1x8x128xf32>
    %416 = vector.shape_cast %415 : vector<1x1x8x128xf32> to vector<8x128xf32>
    %417 = arith.select %411, %416, %403 : vector<8x128xi1>, vector<8x128xf32>
    %c2_340 = arith.constant 2 : index
    %c21_341 = arith.constant 21 : index
    %c0_342 = arith.constant 0 : index
    %c0_343 = arith.constant 0 : index
    %418 = vector.load %arg3[%c2_340, %c21_341, %c0_342, %c0_343] : memref<4x24x8x128xf32, #tpu.memory_space<vmem>>, vector<1x1x8x128xf32>
    %419 = vector.shape_cast %418 : vector<1x1x8x128xf32> to vector<8x128xf32>
    %420 = arith.select %411, %419, %406 : vector<8x128xi1>, vector<8x128xf32>
    %c3_344 = arith.constant 3 : index
    %c21_345 = arith.constant 21 : index
    %c0_346 = arith.constant 0 : index
    %c0_347 = arith.constant 0 : index
    %421 = vector.load %arg3[%c3_344, %c21_345, %c0_346, %c0_347] : memref<4x24x8x128xf32, #tpu.memory_space<vmem>>, vector<1x1x8x128xf32>
    %422 = vector.shape_cast %421 : vector<1x1x8x128xf32> to vector<8x128xf32>
    %423 = arith.select %411, %422, %409 : vector<8x128xi1>, vector<8x128xf32>
    %c22_i32 = arith.constant 22 : i32
    %424 = vector.broadcast %c22_i32 : i32 to vector<8x128xi32>
    %425 = arith.cmpi eq, %105, %424 : vector<8x128xi32>
    %c0_348 = arith.constant 0 : index
    %c22 = arith.constant 22 : index
    %c0_349 = arith.constant 0 : index
    %c0_350 = arith.constant 0 : index
    %426 = vector.load %arg3[%c0_348, %c22, %c0_349, %c0_350] : memref<4x24x8x128xf32, #tpu.memory_space<vmem>>, vector<1x1x8x128xf32>
    %427 = vector.shape_cast %426 : vector<1x1x8x128xf32> to vector<8x128xf32>
    %428 = arith.select %425, %427, %414 : vector<8x128xi1>, vector<8x128xf32>
    %c1_351 = arith.constant 1 : index
    %c22_352 = arith.constant 22 : index
    %c0_353 = arith.constant 0 : index
    %c0_354 = arith.constant 0 : index
    %429 = vector.load %arg3[%c1_351, %c22_352, %c0_353, %c0_354] : memref<4x24x8x128xf32, #tpu.memory_space<vmem>>, vector<1x1x8x128xf32>
    %430 = vector.shape_cast %429 : vector<1x1x8x128xf32> to vector<8x128xf32>
    %431 = arith.select %425, %430, %417 : vector<8x128xi1>, vector<8x128xf32>
    %c2_355 = arith.constant 2 : index
    %c22_356 = arith.constant 22 : index
    %c0_357 = arith.constant 0 : index
    %c0_358 = arith.constant 0 : index
    %432 = vector.load %arg3[%c2_355, %c22_356, %c0_357, %c0_358] : memref<4x24x8x128xf32, #tpu.memory_space<vmem>>, vector<1x1x8x128xf32>
    %433 = vector.shape_cast %432 : vector<1x1x8x128xf32> to vector<8x128xf32>
    %434 = arith.select %425, %433, %420 : vector<8x128xi1>, vector<8x128xf32>
    %c3_359 = arith.constant 3 : index
    %c22_360 = arith.constant 22 : index
    %c0_361 = arith.constant 0 : index
    %c0_362 = arith.constant 0 : index
    %435 = vector.load %arg3[%c3_359, %c22_360, %c0_361, %c0_362] : memref<4x24x8x128xf32, #tpu.memory_space<vmem>>, vector<1x1x8x128xf32>
    %436 = vector.shape_cast %435 : vector<1x1x8x128xf32> to vector<8x128xf32>
    %437 = arith.select %425, %436, %423 : vector<8x128xi1>, vector<8x128xf32>
    %c23_i32 = arith.constant 23 : i32
    %438 = vector.broadcast %c23_i32 : i32 to vector<8x128xi32>
    %439 = arith.cmpi eq, %105, %438 : vector<8x128xi32>
    %c0_363 = arith.constant 0 : index
    %c23 = arith.constant 23 : index
    %c0_364 = arith.constant 0 : index
    %c0_365 = arith.constant 0 : index
    %440 = vector.load %arg3[%c0_363, %c23, %c0_364, %c0_365] : memref<4x24x8x128xf32, #tpu.memory_space<vmem>>, vector<1x1x8x128xf32>
    %441 = vector.shape_cast %440 : vector<1x1x8x128xf32> to vector<8x128xf32>
    %442 = arith.select %439, %441, %428 : vector<8x128xi1>, vector<8x128xf32>
    %c1_366 = arith.constant 1 : index
    %c23_367 = arith.constant 23 : index
    %c0_368 = arith.constant 0 : index
    %c0_369 = arith.constant 0 : index
    %443 = vector.load %arg3[%c1_366, %c23_367, %c0_368, %c0_369] : memref<4x24x8x128xf32, #tpu.memory_space<vmem>>, vector<1x1x8x128xf32>
    %444 = vector.shape_cast %443 : vector<1x1x8x128xf32> to vector<8x128xf32>
    %445 = arith.select %439, %444, %431 : vector<8x128xi1>, vector<8x128xf32>
    %c2_370 = arith.constant 2 : index
    %c23_371 = arith.constant 23 : index
    %c0_372 = arith.constant 0 : index
    %c0_373 = arith.constant 0 : index
    %446 = vector.load %arg3[%c2_370, %c23_371, %c0_372, %c0_373] : memref<4x24x8x128xf32, #tpu.memory_space<vmem>>, vector<1x1x8x128xf32>
    %447 = vector.shape_cast %446 : vector<1x1x8x128xf32> to vector<8x128xf32>
    %448 = arith.select %439, %447, %434 : vector<8x128xi1>, vector<8x128xf32>
    %c3_374 = arith.constant 3 : index
    %c23_375 = arith.constant 23 : index
    %c0_376 = arith.constant 0 : index
    %c0_377 = arith.constant 0 : index
    %449 = vector.load %arg3[%c3_374, %c23_375, %c0_376, %c0_377] : memref<4x24x8x128xf32, #tpu.memory_space<vmem>>, vector<1x1x8x128xf32>
    %450 = vector.shape_cast %449 : vector<1x1x8x128xf32> to vector<8x128xf32>
    %451 = arith.select %439, %450, %437 : vector<8x128xi1>, vector<8x128xf32>
    %452 = arith.mulf %111, %451 : vector<8x128xf32>
    %453 = arith.addf %448, %452 : vector<8x128xf32>
    %454 = arith.mulf %111, %453 : vector<8x128xf32>
    %455 = arith.addf %445, %454 : vector<8x128xf32>
    %456 = arith.mulf %111, %455 : vector<8x128xf32>
    %457 = arith.addf %442, %456 : vector<8x128xf32>
    %c0_378 = arith.constant 0 : index
    %c0_379 = arith.constant 0 : index
    %c0_380 = arith.constant 0 : index
    %458 = vector.load %arg4[%c0_378, %c0_379, %c0_380] : memref<1x8x128xf32, #tpu.memory_space<vmem>>, vector<1x8x128xf32>
    %459 = vector.shape_cast %458 : vector<1x8x128xf32> to vector<8x128xf32>
    %460 = arith.addf %459, %457 : vector<8x128xf32>
    %c0_381 = arith.constant 0 : index
    %c0_382 = arith.constant 0 : index
    %c0_383 = arith.constant 0 : index
    %461 = vector.load %arg4[%c0_381, %c0_382, %c0_383] : memref<1x8x128xf32, #tpu.memory_space<vmem>>, vector<1x8x128xf32>
    %462 = vector.shape_cast %461 : vector<1x8x128xf32> to vector<8x128xf32>
    %463 = vector.shape_cast %460 : vector<8x128xf32> to vector<1x8x128xf32>
    tpu.vector_store %arg4[%c0_381, %c0_382, %c0_383], %463 {strides = array<i32>} : memref<1x8x128xf32, #tpu.memory_space<vmem>>, vector<1x8x128xf32>,
    return
  }
  func.func @transform_0(%arg0: i32, %arg1: i32) -> (i32, i32, i32, i32) {
    %c0_i32 = arith.constant 0 : i32
    %c0_i32_0 = arith.constant 0 : i32
    %c0_i32_1 = arith.constant 0 : i32
    return %arg1, %c0_i32, %arg0, %c0_i32_0 : i32, i32, i32, i32
  }
  func.func @transform_1(%arg0: i32, %arg1: i32) -> (i32, i32, i32, i32) {
    %c0_i32 = arith.constant 0 : i32
    %c0_i32_0 = arith.constant 0 : i32
    %c0_i32_1 = arith.constant 0 : i32
    %c0_i32_2 = arith.constant 0 : i32
    return %c0_i32, %c0_i32_0, %arg0, %c0_i32_1 : i32, i32, i32, i32
  }
  func.func @transform_2(%arg0: i32, %arg1: i32) -> (i32, i32, i32) {
    %c0_i32 = arith.constant 0 : i32
    %c0_i32_0 = arith.constant 0 : i32
    %c0_i32_1 = arith.constant 0 : i32
    return %arg0, %c0_i32, %c0_i32_0 : i32, i32, i32
  }
}

</mosaic_0001>

<llo_original>
// kernel: omega_restraint_forward.1
$region0: #{omega_restraint_forward.1}
  #allocation0 [shape = 'u32[]', space=smem, size = 0x4, offset = 0x4, fixed_abs, tag = 'smem constant byte address 0x4 - core index']
  #allocation1 [shape = 'u32[72,128]{1,0:T(1,128)}', space=vmem, size = 0x9000, scoped, tag = 'internal scratch']
  %s0 = inlined_call_operand.vmem [shape: f32[2,12,8,128], index: 0, kind: input, shape index: {}]
  %s1 = inlined_call_operand.vmem [shape: f32[4,24,8,128], index: 1, kind: input, shape index: {}]
  %s2 = inlined_call_operand.vmem [shape: f32[1,8,128], index: 2, kind: output, shape index: {}]
  %s3 = sld [smem:[#allocation0]]
  $region45: #{omega_restraint_forward.1} parent=0
    _
  %s5 = ssub.s32 1, %s3
  %s6 = scalar_select 0, %s5, %s3
  loop: start=0, step=1, limit=4
  $region2: #{omega_restraint_forward.1} parent=0 // loop_pre_header
    _
  $region3: #{omega_restraint_forward.1} parent=0 // loop_header
    %s8 = sphi 0, %s12
    %p9 = scmp.ge.s32.totalorder %s8, 4
    %s15 = sphi 0, %s27
    %s16 = sphi 0, %s23
    %s17 = sphi 0, %s15
    %s18 = sphi 0, %s16
    %s19 = sphi 0, %s17
    %s20 = sphi 0, %s18
    %s32 = sphi 0, %s34
    %s35 = sphi 0, %s32
    %s36 = sphi 0, %s35
    %s52 = sphi 0, %s36
    %s58 = sphi 0, %s60
    %s61 = sphi 0, %s58
    %s62 = sphi 0, %s61
    %s78 = sphi 0, %s62
    %s84 = sphi 0, %s86
    %s87 = sphi 0, %s84
    %s88 = sphi 0, %s87
    %s104 = sphi 0, %s88
  $region4: #{omega_restraint_forward.1} parent=0 // loop_header_branch
    %11 = sbr.rel (%p9) target = $region8
  $region5: #{omega_restraint_forward.1} parent=0 // loop_body
    %s13 = ssub.s32 %s8, 1
    %s14 = ssub.s32 %s8, 2
    %s21 = sadd.s32 1, %s16
    %p22 = scmp.ge.s32.totalorder %s21, 2
    %s23 = scalar_select %p22, 0, %s21
    %s24 = sadd.s32 1, %s15
    %s25 = scalar_select %p22, %s24, %s15
    %p26 = scmp.ge.s32.totalorder %s25, 1
    %s27 = scalar_select %p26, 0, %s25
    %s28 = ssub.s32 %s16, %s23
    %s29 = ssub.s32 %s15, %s27
    %s30 = sor.u32 %s28, %s29
    %p31 = scmp.eq.s32.totalorder %s30, 0
    %s33 = sadd.s32 %s32, 1
    %s34 = scalar_select %p31, %s32, %s33
    %p37 = pneg %p31
    %p38 = scmp.eq.s32.totalorder %s8, 1
    %p39 = por %p37, %p38
    %p40 = scmp.ne.s32.totalorder %s32, %s35
    %p41 = scmp.eq.s32.totalorder %s8, 0
    %p42 = por %p40, %p41
    %p43 = scmp.ne.s32.totalorder %s32, %s35
    %p44 = scmp.eq.s32.totalorder %s13, 1
    %p45 = por %p43, %p44
    %p46 = scmp.ne.s32.totalorder %s35, %s36
    %p47 = scmp.eq.s32.totalorder %s13, 0
    %p48 = por %p46, %p47
    %p49 = scmp.ne.s32.totalorder %s35, %s36
    %p50 = scmp.eq.s32.totalorder %s14, 1
    %p51 = por %p49, %p50
    %p53 = scmp.ne.s32.totalorder %s36, %s52
    %p54 = scmp.eq.s32.totalorder %s14, 0
    %p55 = por %p53, %p54
    %s56 = ssub.s32 %s15, %s27
    %p57 = scmp.eq.s32.totalorder %s56, 0
    %s59 = sadd.s32 %s58, 1
    %s60 = scalar_select %p57, %s58, %s59
    %p63 = pneg %p57
    %p64 = scmp.eq.s32.totalorder %s8, 1
    %p65 = por %p63, %p64
    %p66 = scmp.ne.s32.totalorder %s58, %s61
    %p67 = scmp.eq.s32.totalorder %s8, 0
    %p68 = por %p66, %p67
    %p69 = scmp.ne.s32.totalorder %s58, %s61
    %p70 = scmp.eq.s32.totalorder %s13, 1
    %p71 = por %p69, %p70
    %p72 = scmp.ne.s32.totalorder %s61, %s62
    %p73 = scmp.eq.s32.totalorder %s13, 0
    %p74 = por %p72, %p73
    %p75 = scmp.ne.s32.totalorder %s61, %s62
    %p76 = scmp.eq.s32.totalorder %s14, 1
    %p77 = por %p75, %p76
    %p79 = scmp.ne.s32.totalorder %s62, %s78
    %p80 = scmp.eq.s32.totalorder %s14, 0
    %p81 = por %p79, %p80
    %s82 = ssub.s32 %s15, %s27
    %p83 = scmp.eq.s32.totalorder %s82, 0
    %s85 = sadd.s32 %s84, 1
    %s86 = scalar_select %p83, %s84, %s85
    %p89 = pneg %p83
    %p90 = scmp.eq.s32.totalorder %s8, 1
    %p91 = por %p89, %p90
    %p92 = scmp.ne.s32.totalorder %s84, %s87
    %p93 = scmp.eq.s32.totalorder %s8, 0
    %p94 = por %p92, %p93
    %p95 = scmp.ne.s32.totalorder %s84, %s87
    %p96 = scmp.eq.s32.totalorder %s13, 1
    %p97 = por %p95, %p96
    %p98 = scmp.ne.s32.totalorder %s87, %s88
    %p99 = scmp.eq.s32.totalorder %s13, 0
    %p100 = por %p98, %p99
    %p101 = scmp.ne.s32.totalorder %s87, %s88
    %p102 = scmp.eq.s32.totalorder %s14, 1
    %p103 = por %p101, %p102
    %p105 = scmp.ne.s32.totalorder %s88, %s104
    %p106 = scmp.eq.s32.totalorder %s14, 0
    %p107 = por %p105, %p106
    %p108 = scmp.le.s32.totalorder 1, %s8
    %p109 = scmp.lt.s32.totalorder %s8, 3
    %p110 = pnand %p108, %p109
    %p111 = pneg %p110
    // Predicated region
    $region9: #{omega_restraint_forward.1} parent=5 // pred_check
      _
    $region10: #{omega_restraint_forward.1} parent=5 // pred_check_branch
      %113 = sbr.rel (%p110) target = $region12
    $region11: #{omega_restraint_forward.1} parent=5 // pred_region
      %s114 = ssub.s32 %s8, 1
      // Predicated region
      $region13: #{omega_restraint_forward.1} parent=11 // pred_check
        %p115 = pneg %p74
      $region14: #{omega_restraint_forward.1} parent=11 // pred_check_branch
        %117 = sbr.rel (%p115) target = $region16
      $region15: #{omega_restraint_forward.1} parent=11 // pred_region
        %p118 = scmp.lt.s32.totalorder %s17, 0
        %s119 = scalar_select %p118, %s17, 0
        %s120 = smul.addr %s119, 8
        %s121 = scalar_lea.vmem %s1, %s120
      $region16: #{omega_restraint_forward.1} parent=11 // pred_fallthru
        _
    $region12: #{omega_restraint_forward.1} parent=5 // pred_fallthru
      _
    %p122 = scmp.lt.s32.totalorder %s8, 2
    // Predicated region
    $region17: #{omega_restraint_forward.1} parent=5 // pred_check
      %p123 = pneg %p122
    $region18: #{omega_restraint_forward.1} parent=5 // pred_check_branch
      %125 = sbr.rel (%p123) target = $region20
    $region19: #{omega_restraint_forward.1} parent=5 // pred_region
      // Predicated region
      $region21: #{omega_restraint_forward.1} parent=19 // pred_check
        %p126 = pneg %p42
      $region22: #{omega_restraint_forward.1} parent=19 // pred_check_branch
        %128 = sbr.rel (%p126) target = $region24
      $region23: #{omega_restraint_forward.1} parent=19 // pred_region
        %p129 = scmp.lt.s32.totalorder %s16, 1
        %s130 = scalar_select %p129, %s16, 1
        %p131 = scmp.lt.s32.totalorder %s15, 0
        %s132 = scalar_select %p131, %s15, 0
        %s133 = smul.addr %s130, 12
        %s134 = sadd.s32 %s132, %s133
        %s135 = smul.addr %s134, 8
        %s136 = scalar_lea.vmem %s0, %s135
      $region24: #{omega_restraint_forward.1} parent=19 // pred_fallthru
        _
    $region20: #{omega_restraint_forward.1} parent=5 // pred_fallthru
      _
    %p137 = scmp.le.s32.totalorder 1, %s8
    %p138 = scmp.lt.s32.totalorder %s8, 3
    %p139 = pnand %p137, %p138
    %p140 = pneg %p139
    // Predicated region
    $region25: #{omega_restraint_forward.1} parent=5 // pred_check
      _
    $region26: #{omega_restraint_forward.1} parent=5 // pred_check_branch
      %142 = sbr.rel (%p139) target = $region28
    $region27: #{omega_restraint_forward.1} parent=5 // pred_region
      %s143 = ssub.s32 %s8, 1
      %p144 = scmp.lt.s32.totalorder %s18, 1
      %s145 = scalar_select %p144, %s18, 1
      %p146 = scmp.lt.s32.totalorder %s17, 0
      %s147 = scalar_select %p146, %s17, 0
      %s148 = smul.addr %s145, 12
      %s149 = sadd.s32 %s147, %s148
      %s150 = smul.addr %s149, 8
      %s151 = scalar_lea.vmem %s0, %s150
      %p152 = pneg %p48
      %p153 = pneg %p45
      %p154 = scmp.lt.s32.totalorder %s17, 0
      %s155 = scalar_select %p154, %s17, 0
      %s156 = smul.addr %s155, 8
      %s157 = scalar_lea.vmem %s1, %s156
      %p158 = pneg %p74
      %p159 = pneg %p71
      %p160 = pneg %p100
      %p161 = pneg %p97
      %p162 = scmp.lt.s32.totalorder %s17, 0
      %s163 = scalar_select %p162, %s17, 0
      %s164 = smul.addr %s163, 8
      %s165 = scalar_lea.vmem %s2, %s164
      %p166 = scmp.lt.s32.totalorder %s18, 1
      %s167 = scalar_select %p166, %s18, 1
      %p168 = scmp.lt.s32.totalorder %s17, 0
      %s169 = scalar_select %p168, %s17, 0
      %s170 = smul.addr %s167, 12
      %s171 = sadd.s32 %s169, %s170
      %s172 = smul.addr %s171, 8
      %s173 = scalar_lea.vmem %s0, %s172
      %p174 = scmp.lt.s32.totalorder %s17, 0
      %s175 = scalar_select %p174, %s17, 0
      %s176 = smul.addr %s175, 8
      %s177 = scalar_lea.vmem %s1, %s176
      %p178 = scmp.lt.s32.totalorder %s17, 0
      %s179 = scalar_select %p178, %s17, 0
      %s180 = smul.addr %s179, 8
      %s181 = scalar_lea.vmem %s2, %s180
      %p182 = scmp.eq.s32.totalorder %s18, 0
      // Predicated region
      $region29: #{omega_restraint_forward.1} parent=27 // pred_check
        %p183 = pneg %p182
      $region30: #{omega_restraint_forward.1} parent=27 // pred_check_branch
        %185 = sbr.rel (%p183) target = $region32
      $region31: #{omega_restraint_forward.1} parent=27 // pred_region
        %186 = vst [vmem:[%s181] sm:$0xff] 0.0
      $region32: #{omega_restraint_forward.1} parent=27 // pred_fallthru
        _
      %v187 = vld [vmem:[%s173] sm:$0xff]
      %v188 = vld [vmem:[%s173 + $0x8] sm:$0xff]
      %v189 = vld [vmem:[%s173 + $0x10] sm:$0xff]
      %v190 = vld [vmem:[%s173 + $0x18] sm:$0xff]
      %v191 = vld [vmem:[%s173 + $0x20] sm:$0xff]
      %v192 = vld [vmem:[%s173 + $0x28] sm:$0xff]
      %v193 = vld [vmem:[%s173 + $0x30] sm:$0xff]
      %v194 = vld [vmem:[%s173 + $0x38] sm:$0xff]
      %v195 = vld [vmem:[%s173 + $0x40] sm:$0xff]
      %v196 = vld [vmem:[%s173 + $0x48] sm:$0xff]
      %v197 = vld [vmem:[%s173 + $0x50] sm:$0xff]
      %v198 = vld [vmem:[%s173 + $0x58] sm:$0xff]
      %v199 = vsub.f32 %v187, %v190
      %v200 = vsub.f32 %v188, %v191
      %v201 = vsub.f32 %v189, %v192
      %v202 = vsub.f32 %v193, %v190
      %v203 = vsub.f32 %v194, %v191
      %v204 = vsub.f32 %v195, %v192
      %v205 = vsub.f32 %v196, %v193
      %v206 = vsub.f32 %v197, %v194
      %v207 = vsub.f32 %v198, %v195
      %v208 = vmul.f32 %v202, %v202
      %v209 = vmul.f32 %v203, %v203
      %v210 = vadd.f32 %v208, %v209
      %v211 = vmul.f32 %v204, %v204
      %v212 = vadd.f32 %v210, %v211
      %v213 = vadd.f32 %v212, 1e-12
      %v214 = vrsqrt.pop %v213
      %v215 = vmul.f32 %v214, %v213
      %v216 = vmul.f32 %v215, %v214
      %v217 = vmul.f32 0.5, %v216
      %v218 = vsub.f32 1.5, %v217
      %v219 = vmul.f32 %v214, %v218
      %vm220 = vweird.f32 %v213
      %vm221 = vweird.f32 %v214
      %vm222 = vmor %vm220, %vm221
      %v223 = vsel %vm222, %v214, %v219
      %v224 = vmul.f32 %v202, %v223
      %v225 = vmul.f32 %v203, %v223
      %v226 = vmul.f32 %v204, %v223
      %v227 = vmul.f32 %v199, %v224
      %v228 = vmul.f32 %v200, %v225
      %v229 = vadd.f32 %v227, %v228
      %v230 = vmul.f32 %v201, %v226
      %v231 = vadd.f32 %v229, %v230
      %v232 = vmul.f32 %v231, %v224
      %v233 = vsub.f32 %v199, %v232
      %v234 = vmul.f32 %v231, %v225
      %v235 = vsub.f32 %v200, %v234
      %v236 = vmul.f32 %v231, %v226
      %v237 = vsub.f32 %v201, %v236
      %v238 = vmul.f32 %v205, %v224
      %v239 = vmul.f32 %v206, %v225
      %v240 = vadd.f32 %v238, %v239
      %v241 = vmul.f32 %v207, %v226
      %v242 = vadd.f32 %v240, %v241
      %v243 = vmul.f32 %v242, %v224
      %v244 = vsub.f32 %v205, %v243
      %v245 = vmul.f32 %v242, %v225
      %v246 = vsub.f32 %v206, %v245
      %v247 = vmul.f32 %v242, %v226
      %v248 = vsub.f32 %v207, %v247
      %v249 = vmul.f32 %v233, %v244
      %v250 = vmul.f32 %v235, %v246
      %v251 = vadd.f32 %v249, %v250
      %v252 = vmul.f32 %v237, %v248
      %v253 = vadd.f32 %v251, %v252
      %v254 = vmul.f32 %v225, %v237
      %v255 = vmul.f32 %v226, %v235
      %v256 = vsub.f32 %v254, %v255
      %v257 = vmul.f32 %v226, %v233
      %v258 = vmul.f32 %v224, %v237
      %v259 = vsub.f32 %v257, %v258
      %v260 = vmul.f32 %v224, %v235
      %v261 = vmul.f32 %v225, %v233
      %v262 = vsub.f32 %v260, %v261
      %v263 = vmul.f32 %v256, %v244
      %v264 = vmul.f32 %v259, %v246
      %v265 = vadd.f32 %v263, %v264
      %v266 = vmul.f32 %v262, %v248
      %v267 = vadd.f32 %v265, %v266
      %v268 = vand.u32 2147483647, %v253
      %v269 = vand.u32 2147483647, %v267
      %v270 = vmin.f32 %v268, %v269
      %v271 = vmax.f32 %v268, %v269
      %v272 = vrcp.pop %v271
      %v273 = vmul.f32 %v271, %v272
      %v274 = vsub.f32 1.0, %v273
      %v275 = vmul.f32 %v272, %v274
      %v276 = vadd.f32 %v272, %v275
      %vm277 = vweird.f32 %v271
      %vm278 = vweird.f32 %v272
      %vm279 = vmor %vm277, %vm278
      %v280 = vsel %vm279, %v272, %v276
      %v281 = vand.u32 2147483647, %v271
      %vm282 = vcmp.eq.f32.partialorder %v281, 8.507059e+37
      %v283 = vand.u32 %v271, 2147483648
      %v284 = vor.u32 1.1754944e-38, %v283
      %v285 = vsel %vm282, %v284, %v280
      %v286 = vmul.f32 %v270, %v285
      %v287 = vmul.f32 %v286, %v286
      %v288 = vmul.f32 0.002785687, %v287
      %v289 = vadd.f32 %v288, -0.015866
      %v290 = vmul.f32 %v289, %v287
      %v291 = vadd.f32 %v290, 0.04247222
      %v292 = vmul.f32 %v291, %v287
      %v293 = vadd.f32 %v292, -0.074975304
      %v294 = vmul.f32 %v293, %v287
      %v295 = vadd.f32 %v294, 0.1064488
      %v296 = vmul.f32 %v295, %v287
      %v297 = vadd.f32 %v296, -0.14207031
      %v298 = vmul.f32 %v297, %v287
      %v299 = vadd.f32 %v298, 0.19993454
      %v300 = vmul.f32 %v299, %v287
      %v301 = vadd.f32 %v300, -0.33333147
      %v302 = vmul.f32 %v301, %v287
      %v303 = vmul.f32 %v302, %v286
      %v304 = vadd.f32 %v303, %v286
      %vm305 = vcmp.gt.f32.partialorder %v269, %v268
      %v306 = vsub.f32 1.5707964, %v304
      %v307 = vsel %vm305, %v306, %v304
      %vm308 = vcmp.lt.f32.partialorder %v253, 0.0
      %v309 = vsub.f32 3.1415927, %v307
      %v310 = vsel %vm308, %v309, %v307
      %vm311 = vcmp.lt.s32.totalorder %v253, 0
      %v312 = vsel %vm311, 3.1415927, 0.0
      %vm313 = vcmp.eq.f32.partialorder %v267, 0.0
      %v314 = vsel %vm313, %v312, %v310
      %vm315 = vcmp.ne.f32.partialorder %v253, %v253
      %vm316 = vcmp.ne.f32.partialorder %v267, %v267
      %vm317 = vmor %vm315, %vm316
      %v318 = vsel %vm317, nan, %v314
      %vm319 = vcmp.lt.f32.partialorder %v253, 0.0
      %v320 = vsel %vm319, 2.3561945, 0.7853982
      %vm321 = vcmp.eq.s32.totalorder %v268, inf
      %vm322 = vcmp.eq.s32.totalorder %v269, inf
      %vm323 = vmand %vm321, %vm322
      %v324 = vsel %vm323, %v320, %v318
      %v325 = vand.u32 2147483647, %v324
      %v326 = vand.u32 %v267, 2147483648
      %v327 = vor.u32 %v325, %v326
      %vm328 = vcmp.lt.f32.partialorder %v327, -3.010693
      %v329 = vadd.f32 %v327, 6.2831855
      %v330 = vsel %vm328, %v329, %v327
      %v331 = vsub.f32 %v330, -3.010693
      %v332 = vrcp.pop 0.2617994
      %v333 = vmul.f32 0.2617994, %v332
      %v334 = vsub.f32 1.0, %v333
      %v335 = vmul.f32 %v332, %v334
      %v336 = vadd.f32 %v332, %v335
      %vm337 = vweird.f32 %v332
      %v338 = vsel %vm337, %v332, %v336
      %v339 = vmul.f32 %v331, %v338
      %v340 = vfloor.f32 %v339
      %v341 = vmax.f32 %v340, 0.0
      %v342 = vmin.f32 %v341, 23.0
      %v343 = vcvt.f32.s32.to.zero.pseudo %v342
      %v344 = vcvt.s32.f32 %v343
      %v345 = vmul.f32 %v344, 0.2617994
      %v346 = vadd.f32 %v345, -3.010693
      %v347 = vsub.f32 %v330, %v346
      %vm348 = vcmp.eq.s32.totalorder %v343, 0
      %v349 = vld [vmem:[%s177] sm:$0xff]
      %v350 = vsel %vm348, %v349, 0.0
      %s351 = scalar_lea.vmem %s177, 192
      %v352 = vld [vmem:[%s351] sm:$0xff]
      %v353 = vsel %vm348, %v352, 0.0
      %s354 = scalar_lea.vmem %s177, 384
      %v355 = vld [vmem:[%s354] sm:$0xff]
      %v356 = vsel %vm348, %v355, 0.0
      %s357 = scalar_lea.vmem %s177, 576
      %v358 = vld [vmem:[%s357] sm:$0xff]
      %v359 = vsel %vm348, %v358, 0.0
      %vm360 = vcmp.eq.s32.totalorder %v343, 1
      %s361 = scalar_lea.vmem %s177, 8
      %v362 = vld [vmem:[%s361] sm:$0xff]
      %v363 = vsel %vm360, %v362, %v350
      %s364 = scalar_lea.vmem %s177, 200
      %v365 = vld [vmem:[%s364] sm:$0xff]
      %v366 = vsel %vm360, %v365, %v353
      %s367 = scalar_lea.vmem %s177, 392
      %v368 = vld [vmem:[%s367] sm:$0xff]
      %v369 = vsel %vm360, %v368, %v356
      %s370 = scalar_lea.vmem %s177, 584
      %v371 = vld [vmem:[%s370] sm:$0xff]
      %v372 = vsel %vm360, %v371, %v359
      %vm373 = vcmp.eq.s32.totalorder %v343, 2
      %s374 = scalar_lea.vmem %s177, 16
      %v375 = vld [vmem:[%s374] sm:$0xff]
      %v376 = vsel %vm373, %v375, %v363
      %s377 = scalar_lea.vmem %s177, 208
      %v378 = vld [vmem:[%s377] sm:$0xff]
      %v379 = vsel %vm373, %v378, %v366
      %s380 = scalar_lea.vmem %s177, 400
      %v381 = vld [vmem:[%s380] sm:$0xff]
      %v382 = vsel %vm373, %v381, %v369
      %s383 = scalar_lea.vmem %s177, 592
      %v384 = vld [vmem:[%s383] sm:$0xff]
      %v385 = vsel %vm373, %v384, %v372
      %vm386 = vcmp.eq.s32.totalorder %v343, 3
      %s387 = scalar_lea.vmem %s177, 24
      %v388 = vld [vmem:[%s387] sm:$0xff]
      %v389 = vsel %vm386, %v388, %v376
      %s390 = scalar_lea.vmem %s177, 216
      %v391 = vld [vmem:[%s390] sm:$0xff]
      %v392 = vsel %vm386, %v391, %v379
      %s393 = scalar_lea.vmem %s177, 408
      %v394 = vld [vmem:[%s393] sm:$0xff]
      %v395 = vsel %vm386, %v394, %v382
      %s396 = scalar_lea.vmem %s177, 600
      %v397 = vld [vmem:[%s396] sm:$0xff]
      %v398 = vsel %vm386, %v397, %v385
      %vm399 = vcmp.eq.s32.totalorder %v343, 4
      %s400 = scalar_lea.vmem %s177, 32
      %v401 = vld [vmem:[%s400] sm:$0xff]
      %v402 = vsel %vm399, %v401, %v389
      %s403 = scalar_lea.vmem %s177, 224
      %v404 = vld [vmem:[%s403] sm:$0xff]
      %v405 = vsel %vm399, %v404, %v392
      %s406 = scalar_lea.vmem %s177, 416
      %v407 = vld [vmem:[%s406] sm:$0xff]
      %v408 = vsel %vm399, %v407, %v395
      %s409 = scalar_lea.vmem %s177, 608
      %v410 = vld [vmem:[%s409] sm:$0xff]
      %v411 = vsel %vm399, %v410, %v398
      %vm412 = vcmp.eq.s32.totalorder %v343, 5
      %s413 = scalar_lea.vmem %s177, 40
      %v414 = vld [vmem:[%s413] sm:$0xff]
      %v415 = vsel %vm412, %v414, %v402
      %s416 = scalar_lea.vmem %s177, 232
      %v417 = vld [vmem:[%s416] sm:$0xff]
      %v418 = vsel %vm412, %v417, %v405
      %s419 = scalar_lea.vmem %s177, 424
      %v420 = vld [vmem:[%s419] sm:$0xff]
      %v421 = vsel %vm412, %v420, %v408
      %s422 = scalar_lea.vmem %s177, 616
      %v423 = vld [vmem:[%s422] sm:$0xff]
      %v424 = vsel %vm412, %v423, %v411
      %vm425 = vcmp.eq.s32.totalorder %v343, 6
      %s426 = scalar_lea.vmem %s177, 48
      %v427 = vld [vmem:[%s426] sm:$0xff]
      %v428 = vsel %vm425, %v427, %v415
      %s429 = scalar_lea.vmem %s177, 240
      %v430 = vld [vmem:[%s429] sm:$0xff]
      %v431 = vsel %vm425, %v430, %v418
      %s432 = scalar_lea.vmem %s177, 432
      %v433 = vld [vmem:[%s432] sm:$0xff]
      %v434 = vsel %vm425, %v433, %v421
      %s435 = scalar_lea.vmem %s177, 624
      %v436 = vld [vmem:[%s435] sm:$0xff]
      %v437 = vsel %vm425, %v436, %v424
      %vm438 = vcmp.eq.s32.totalorder %v343, 7
      %s439 = scalar_lea.vmem %s177, 56
      %v440 = vld [vmem:[%s439] sm:$0xff]
      %v441 = vsel %vm438, %v440, %v428
      %s442 = scalar_lea.vmem %s177, 248
      %v443 = vld [vmem:[%s442] sm:$0xff]
      %v444 = vsel %vm438, %v443, %v431
      %s445 = scalar_lea.vmem %s177, 440
      %v446 = vld [vmem:[%s445] sm:$0xff]
      %v447 = vsel %vm438, %v446, %v434
      %s448 = scalar_lea.vmem %s177, 632
      %v449 = vld [vmem:[%s448] sm:$0xff]
      %v450 = vsel %vm438, %v449, %v437
      %vm451 = vcmp.eq.s32.totalorder %v343, 8
      %s452 = scalar_lea.vmem %s177, 64
      %v453 = vld [vmem:[%s452] sm:$0xff]
      %v454 = vsel %vm451, %v453, %v441
      %s455 = scalar_lea.vmem %s177, 256
      %v456 = vld [vmem:[%s455] sm:$0xff]
      %v457 = vsel %vm451, %v456, %v444
      %s458 = scalar_lea.vmem %s177, 448
      %v459 = vld [vmem:[%s458] sm:$0xff]
      %v460 = vsel %vm451, %v459, %v447
      %s461 = scalar_lea.vmem %s177, 640
      %v462 = vld [vmem:[%s461] sm:$0xff]
      %v463 = vsel %vm451, %v462, %v450
      %vm464 = vcmp.eq.s32.totalorder %v343, 9
      %s465 = scalar_lea.vmem %s177, 72
      %v466 = vld [vmem:[%s465] sm:$0xff]
      %v467 = vsel %vm464, %v466, %v454
      %s468 = scalar_lea.vmem %s177, 264
      %v469 = vld [vmem:[%s468] sm:$0xff]
      %v470 = vsel %vm464, %v469, %v457
      %s471 = scalar_lea.vmem %s177, 456
      %v472 = vld [vmem:[%s471] sm:$0xff]
      %v473 = vsel %vm464, %v472, %v460
      %s474 = scalar_lea.vmem %s177, 648
      %v475 = vld [vmem:[%s474] sm:$0xff]
      %v476 = vsel %vm464, %v475, %v463
      %vm477 = vcmp.eq.s32.totalorder %v343, 10
      %s478 = scalar_lea.vmem %s177, 80
      %v479 = vld [vmem:[%s478] sm:$0xff]
      %v480 = vsel %vm477, %v479, %v467
      %s481 = scalar_lea.vmem %s177, 272
      %v482 = vld [vmem:[%s481] sm:$0xff]
      %v483 = vsel %vm477, %v482, %v470
      %s484 = scalar_lea.vmem %s177, 464
      %v485 = vld [vmem:[%s484] sm:$0xff]
      %v486 = vsel %vm477, %v485, %v473
      %s487 = scalar_lea.vmem %s177, 656
      %v488 = vld [vmem:[%s487] sm:$0xff]
      %v489 = vsel %vm477, %v488, %v476
      %vm490 = vcmp.eq.s32.totalorder %v343, 11
      %s491 = scalar_lea.vmem %s177, 88
      %v492 = vld [vmem:[%s491] sm:$0xff]
      %v493 = vsel %vm490, %v492, %v480
      %s494 = scalar_lea.vmem %s177, 280
      %v495 = vld [vmem:[%s494] sm:$0xff]
      %v496 = vsel %vm490, %v495, %v483
      %s497 = scalar_lea.vmem %s177, 472
      %v498 = vld [vmem:[%s497] sm:$0xff]
      %v499 = vsel %vm490, %v498, %v486
      %s500 = scalar_lea.vmem %s177, 664
      %v501 = vld [vmem:[%s500] sm:$0xff]
      %v502 = vsel %vm490, %v501, %v489
      %vm503 = vcmp.eq.s32.totalorder %v343, 12
      %s504 = scalar_lea.vmem %s177, 96
      %v505 = vld [vmem:[%s504] sm:$0xff]
      %v506 = vsel %vm503, %v505, %v493
      %s507 = scalar_lea.vmem %s177, 288
      %v508 = vld [vmem:[%s507] sm:$0xff]
      %v509 = vsel %vm503, %v508, %v496
      %s510 = scalar_lea.vmem %s177, 480
      %v511 = vld [vmem:[%s510] sm:$0xff]
      %v512 = vsel %vm503, %v511, %v499
      %s513 = scalar_lea.vmem %s177, 672
      %v514 = vld [vmem:[%s513] sm:$0xff]
      %v515 = vsel %vm503, %v514, %v502
      %vm516 = vcmp.eq.s32.totalorder %v343, 13
      %s517 = scalar_lea.vmem %s177, 104
      %v518 = vld [vmem:[%s517] sm:$0xff]
      %v519 = vsel %vm516, %v518, %v506
      %s520 = scalar_lea.vmem %s177, 296
      %v521 = vld [vmem:[%s520] sm:$0xff]
      %v522 = vsel %vm516, %v521, %v509
      %s523 = scalar_lea.vmem %s177, 488
      %v524 = vld [vmem:[%s523] sm:$0xff]
      %v525 = vsel %vm516, %v524, %v512
      %s526 = scalar_lea.vmem %s177, 680
      %v527 = vld [vmem:[%s526] sm:$0xff]
      %v528 = vsel %vm516, %v527, %v515
      %vm529 = vcmp.eq.s32.totalorder %v343, 14
      %s530 = scalar_lea.vmem %s177, 112
      %v531 = vld [vmem:[%s530] sm:$0xff]
      %v532 = vsel %vm529, %v531, %v519
      %s533 = scalar_lea.vmem %s177, 304
      %v534 = vld [vmem:[%s533] sm:$0xff]
      %v535 = vsel %vm529, %v534, %v522
      %s536 = scalar_lea.vmem %s177, 496
      %v537 = vld [vmem:[%s536] sm:$0xff]
      %v538 = vsel %vm529, %v537, %v525
      %s539 = scalar_lea.vmem %s177, 688
      %v540 = vld [vmem:[%s539] sm:$0xff]
      %v541 = vsel %vm529, %v540, %v528
      %vm542 = vcmp.eq.s32.totalorder %v343, 15
      %s543 = scalar_lea.vmem %s177, 120
      %v544 = vld [vmem:[%s543] sm:$0xff]
      %v545 = vsel %vm542, %v544, %v532
      %s546 = scalar_lea.vmem %s177, 312
      %v547 = vld [vmem:[%s546] sm:$0xff]
      %v548 = vsel %vm542, %v547, %v535
      %s549 = scalar_lea.vmem %s177, 504
      %v550 = vld [vmem:[%s549] sm:$0xff]
      %v551 = vsel %vm542, %v550, %v538
      %s552 = scalar_lea.vmem %s177, 696
      %v553 = vld [vmem:[%s552] sm:$0xff]
      %v554 = vsel %vm542, %v553, %v541
      %vm555 = vcmp.eq.s32.totalorder %v343, 16
      %s556 = scalar_lea.vmem %s177, 128
      %v557 = vld [vmem:[%s556] sm:$0xff]
      %v558 = vsel %vm555, %v557, %v545
      %s559 = scalar_lea.vmem %s177, 320
      %v560 = vld [vmem:[%s559] sm:$0xff]
      %v561 = vsel %vm555, %v560, %v548
      %s562 = scalar_lea.vmem %s177, 512
      %v563 = vld [vmem:[%s562] sm:$0xff]
      %v564 = vsel %vm555, %v563, %v551
      %s565 = scalar_lea.vmem %s177, 704
      %v566 = vld [vmem:[%s565] sm:$0xff]
      %v567 = vsel %vm555, %v566, %v554
      %vm568 = vcmp.eq.s32.totalorder %v343, 17
      %s569 = scalar_lea.vmem %s177, 136
      %v570 = vld [vmem:[%s569] sm:$0xff]
      %v571 = vsel %vm568, %v570, %v558
      %s572 = scalar_lea.vmem %s177, 328
      %v573 = vld [vmem:[%s572] sm:$0xff]
      %v574 = vsel %vm568, %v573, %v561
      %s575 = scalar_lea.vmem %s177, 520
      %v576 = vld [vmem:[%s575] sm:$0xff]
      %v577 = vsel %vm568, %v576, %v564
      %s578 = scalar_lea.vmem %s177, 712
      %v579 = vld [vmem:[%s578] sm:$0xff]
      %v580 = vsel %vm568, %v579, %v567
      %vm581 = vcmp.eq.s32.totalorder %v343, 18
      %s582 = scalar_lea.vmem %s177, 144
      %v583 = vld [vmem:[%s582] sm:$0xff]
      %v584 = vsel %vm581, %v583, %v571
      %s585 = scalar_lea.vmem %s177, 336
      %v586 = vld [vmem:[%s585] sm:$0xff]
      %v587 = vsel %vm581, %v586, %v574
      %s588 = scalar_lea.vmem %s177, 528
      %v589 = vld [vmem:[%s588] sm:$0xff]
      %v590 = vsel %vm581, %v589, %v577
      %s591 = scalar_lea.vmem %s177, 720
      %v592 = vld [vmem:[%s591] sm:$0xff]
      %v593 = vsel %vm581, %v592, %v580
      %vm594 = vcmp.eq.s32.totalorder %v343, 19
      %s595 = scalar_lea.vmem %s177, 152
      %v596 = vld [vmem:[%s595] sm:$0xff]
      %v597 = vsel %vm594, %v596, %v584
      %s598 = scalar_lea.vmem %s177, 344
      %v599 = vld [vmem:[%s598] sm:$0xff]
      %v600 = vsel %vm594, %v599, %v587
      %s601 = scalar_lea.vmem %s177, 536
      %v602 = vld [vmem:[%s601] sm:$0xff]
      %v603 = vsel %vm594, %v602, %v590
      %s604 = scalar_lea.vmem %s177, 728
      %v605 = vld [vmem:[%s604] sm:$0xff]
      %v606 = vsel %vm594, %v605, %v593
      %vm607 = vcmp.eq.s32.totalorder %v343, 20
      %s608 = scalar_lea.vmem %s177, 160
      %v609 = vld [vmem:[%s608] sm:$0xff]
      %v610 = vsel %vm607, %v609, %v597
      %s611 = scalar_lea.vmem %s177, 352
      %v612 = vld [vmem:[%s611] sm:$0xff]
      %v613 = vsel %vm607, %v612, %v600
      %s614 = scalar_lea.vmem %s177, 544
      %v615 = vld [vmem:[%s614] sm:$0xff]
      %v616 = vsel %vm607, %v615, %v603
      %s617 = scalar_lea.vmem %s177, 736
      %v618 = vld [vmem:[%s617] sm:$0xff]
      %v619 = vsel %vm607, %v618, %v606
      %vm620 = vcmp.eq.s32.totalorder %v343, 21
      %s621 = scalar_lea.vmem %s177, 168
      %v622 = vld [vmem:[%s621] sm:$0xff]
      %v623 = vsel %vm620, %v622, %v610
      %s624 = scalar_lea.vmem %s177, 360
      %v625 = vld [vmem:[%s624] sm:$0xff]
      %v626 = vsel %vm620, %v625, %v613
      %s627 = scalar_lea.vmem %s177, 552
      %v628 = vld [vmem:[%s627] sm:$0xff]
      %v629 = vsel %vm620, %v628, %v616
      %s630 = scalar_lea.vmem %s177, 744
      %v631 = vld [vmem:[%s630] sm:$0xff]
      %v632 = vsel %vm620, %v631, %v619
      %vm633 = vcmp.eq.s32.totalorder %v343, 22
      %s634 = scalar_lea.vmem %s177, 176
      %v635 = vld [vmem:[%s634] sm:$0xff]
      %v636 = vsel %vm633, %v635, %v623
      %s637 = scalar_lea.vmem %s177, 368
      %v638 = vld [vmem:[%s637] sm:$0xff]
      %v639 = vsel %vm633, %v638, %v626
      %s640 = scalar_lea.vmem %s177, 560
      %v641 = vld [vmem:[%s640] sm:$0xff]
      %v642 = vsel %vm633, %v641, %v629
      %s643 = scalar_lea.vmem %s177, 752
      %v644 = vld [vmem:[%s643] sm:$0xff]
      %v645 = vsel %vm633, %v644, %v632
      %vm646 = vcmp.eq.s32.totalorder %v343, 23
      %s647 = scalar_lea.vmem %s177, 184
      %v648 = vld [vmem:[%s647] sm:$0xff]
      %v649 = vsel %vm646, %v648, %v636
      %s650 = scalar_lea.vmem %s177, 376
      %v651 = vld [vmem:[%s650] sm:$0xff]
      %v652 = vsel %vm646, %v651, %v639
      %s653 = scalar_lea.vmem %s177, 568
      %v654 = vld [vmem:[%s653] sm:$0xff]
      %v655 = vsel %vm646, %v654, %v642
      %s656 = scalar_lea.vmem %s177, 760
      %v657 = vld [vmem:[%s656] sm:$0xff]
      %v658 = vsel %vm646, %v657, %v645
      %v659 = vmul.f32 %v347, %v658
      %v660 = vadd.f32 %v655, %v659
      %v661 = vmul.f32 %v347, %v660
      %v662 = vadd.f32 %v652, %v661
      %v663 = vmul.f32 %v347, %v662
      %v664 = vadd.f32 %v649, %v663
      %v665 = vld [vmem:[%s181] sm:$0xff]
      %v666 = vadd.f32 %v665, %v664
      %667 = vst [vmem:[%s181] sm:$0xff] %v666
      %p668 = scmp.lt.s32.totalorder %s17, 0
      %s669 = scalar_select %p668, %s17, 0
      %s670 = smul.addr %s669, 8
      %s671 = scalar_lea.vmem %s2, %s670
      // Predicated region
      $region33: #{omega_restraint_forward.1} parent=27 // pred_check
        %p672 = pneg %p97
      $region34: #{omega_restraint_forward.1} parent=27 // pred_check_branch
        %674 = sbr.rel (%p672) target = $region36
      $region35: #{omega_restraint_forward.1} parent=27 // pred_region
        _
      $region36: #{omega_restraint_forward.1} parent=27 // pred_fallthru
        _
      // Predicated region
      $region37: #{omega_restraint_forward.1} parent=27 // pred_check
        %p675 = pneg %p97
      $region38: #{omega_restraint_forward.1} parent=27 // pred_check_branch
        %677 = sbr.rel (%p675) target = $region40
      $region39: #{omega_restraint_forward.1} parent=27 // pred_region
        %p678 = scmp.lt.s32.totalorder %s17, 0
        %s679 = scalar_select %p678, %s17, 0
        %s680 = smul.addr %s679, 8
        %s681 = scalar_lea.vmem %s2, %s680
      $region40: #{omega_restraint_forward.1} parent=27 // pred_fallthru
        _
    $region28: #{omega_restraint_forward.1} parent=5 // pred_fallthru
      _
    %p682 = scmp.le.s32.totalorder 2, %s8
    // Predicated region
    $region41: #{omega_restraint_forward.1} parent=5 // pred_check
      %p683 = pneg %p682
    $region42: #{omega_restraint_forward.1} parent=5 // pred_check_branch
      %685 = sbr.rel (%p683) target = $region44
    $region43: #{omega_restraint_forward.1} parent=5 // pred_region
      %s686 = ssub.s32 %s8, 2
    $region44: #{omega_restraint_forward.1} parent=5 // pred_fallthru
      _
  $region6: #{omega_restraint_forward.1} parent=0 // loop_footer
    %s12 = sadd.s32 1, %s8
  $region7: #{omega_restraint_forward.1} parent=0 // loop_footer_branch
    %7 = sbr.rel target = $region3
  $region8: #{omega_restraint_forward.1} parent=0 // loop_exit
    _

</llo_original>
